<compile_context>
chip_gen: v7x
topology: tpu7x:2x2x1
jax: 0.10.0
libtpu: 0.0.40
codegen_flags: <defaults>
</compile_context>

<pallas_src>
from types import SimpleNamespace

import jax
import jax.numpy as jnp
import numpy as np
from jax.experimental import pallas as pl
from jax.experimental.pallas import tpu as pltpu

BOTTLENECK = 1024   # hard-coded by `latent_vector.reshape(-1, 1024)` in forward
BN_EPS = 1e-5
OUT_PAD = 128       # lane-dense padding of the 3-channel output
HID_PAD = 128       # hidden channels padded up to a multiple of this


# ----------------------------------------------------------------------------
# Pallas kernel: fused first-layer activation + Mapping2Dto3D MLP tail.
# One grid step = one primitive x one M tile x one batch element.
# ----------------------------------------------------------------------------
def _make_decoder_kernel(num_layers):
    def kernel(h1_ref, lat_ref, w2_ref, t2_ref, wl_ref, tl_ref,
               wlast_ref, blast_ref, out_ref):
        # Fused first-layer activation: relu(pts@w1*s1 + lat*s1 + t1), built in
        # VMEM — no HBM round-trip of the (P, B, N, K) broadcast intermediate.
        a0 = jnp.maximum(h1_ref[...].astype(jnp.float32) + lat_ref[...], 0.0)
        a0 = a0.astype(jnp.bfloat16)                              # (TM, K)

        # conv2 (BN scale pre-folded into weight) + shift + ReLU; f32 accumulate.
        h = jnp.dot(a0, w2_ref[...], preferred_element_type=jnp.float32)
        h = jnp.maximum(h + t2_ref[...], 0.0)                     # (TM, Hp)

        # hidden conv_list layers (static unroll)
        for i in range(num_layers):
            h = jnp.dot(h.astype(jnp.bfloat16), wl_ref[i],
                        preferred_element_type=jnp.float32)
            h = jnp.maximum(h + tl_ref[i], 0.0)

        # last_conv (no BN, no activation); lane-padded output, stored bf16.
        out = jnp.dot(h.astype(jnp.bfloat16), wlast_ref[...],
                      preferred_element_type=jnp.float32) + blast_ref[...]
        out_ref[...] = out.astype(out_ref.dtype)                  # (TM, OUT_PAD)

    return kernel


def atlasnet_decoders_pallas(h1_pre, lat_c, stacked, num_layers, tile_m=512):
    """Run the decoders for all requested primitives in one pallas_call.

    h1_pre: (P, N, K) bf16   batch-independent first matmul, BN scale folded in.
    lat_c:  (P, B, 1, K) f32 per-primitive latent affine (lat*s1 + t1).
    Returns (P, B, N, OUT_PAD) bf16; real output channels are [..., :3].
    """
    P, N, K = h1_pre.shape
    B = lat_c.shape[1]
    Hp = stacked["w2"].shape[2]
    C = stacked["wlast"].shape[2]
    L = num_layers

    tm = min(tile_m, N)
    if N % tm != 0:
        tm = N                       # small / ragged N: single M tile
    nt = N // tm

    # Batch innermost: the large h1_pre tile stays resident across B; only the
    # tiny latent row is re-fetched per batch element.
    grid = (P, nt, B)

    flops = 2 * P * B * N * (K * Hp + L * Hp * Hp + Hp * C)
    bytes_accessed = int(
        h1_pre.size * 2 + lat_c.size * 4 * nt
        + (stacked["w2"].size + stacked["wl"].size + stacked["wlast"].size) * 2
        + (stacked["t2"].size + stacked["tl"].size + stacked["blast"].size) * 4
        + P * B * N * C * 2)
    cost = pl.CostEstimate(flops=int(flops), transcendentals=0,
                           bytes_accessed=bytes_accessed)

    return pl.pallas_call(
        _make_decoder_kernel(L),
        out_shape=jax.ShapeDtypeStruct((P, B, N, C), jnp.bfloat16),
        grid=grid,
        in_specs=[
            pl.BlockSpec((None, tm, K), lambda p, m, b: (p, m, 0)),          # h1_pre bf16
            pl.BlockSpec((None, None, 1, K), lambda p, m, b: (p, b, 0, 0)),  # lat_c  f32
            pl.BlockSpec((None, K, Hp), lambda p, m, b: (p, 0, 0)),          # w2*s2  bf16
            pl.BlockSpec((None, 1, Hp), lambda p, m, b: (p, 0, 0)),          # t2     f32
            pl.BlockSpec((None, L, Hp, Hp), lambda p, m, b: (p, 0, 0, 0)),   # wl*sl  bf16
            pl.BlockSpec((None, L, 1, Hp), lambda p, m, b: (p, 0, 0, 0)),    # tl     f32
            pl.BlockSpec((None, Hp, C), lambda p, m, b: (p, 0, 0)),          # wlast  bf16
            pl.BlockSpec((None, 1, C), lambda p, m, b: (p, 0, 0)),           # blast  f32
        ],
        out_specs=pl.BlockSpec((None, None, tm, C),
                               lambda p, m, b: (p, b, m, 0)),
        compiler_params=pltpu.CompilerParams(
            dimension_semantics=("parallel", "parallel", "parallel")),
        cost_estimate=cost,
    )(h1_pre, lat_c, stacked["w2"], stacked["t2"], stacked["wl"], stacked["tl"],
      stacked["wlast"], stacked["blast"])


# ----------------------------------------------------------------------------
# Parameter init (deterministic), BN fusion + scale folding, hidden-dim padding
# ----------------------------------------------------------------------------
def init_decoder_params(key, dim, bottleneck, hidden, num_layers):
    ks = iter(jax.random.split(key, 32))
    nrm = lambda shape, s: jax.random.normal(next(ks), shape, jnp.float32) * s
    uni = lambda shape, lo, hi: jax.random.uniform(next(ks), shape, jnp.float32, lo, hi)

    raw = dict(
        w1=nrm((dim, bottleneck), 0.3), b1=nrm((bottleneck,), 0.1),
        g1=uni((bottleneck,), 0.9, 1.1), be1=nrm((bottleneck,), 0.05),
        m1=nrm((bottleneck,), 0.05), v1=uni((bottleneck,), 0.5, 1.5),
        w2=nrm((bottleneck, hidden), 0.03), b2=nrm((hidden,), 0.1),
        g2=uni((hidden,), 0.9, 1.1), be2=nrm((hidden,), 0.05),
        m2=nrm((hidden,), 0.05), v2=uni((hidden,), 0.5, 1.5),
        wl=nrm((num_layers, hidden, hidden), 0.1), bl=nrm((num_layers, hidden), 0.1),
        gl=uni((num_layers, hidden), 0.9, 1.1), bel=nrm((num_layers, hidden), 0.05),
        ml=nrm((num_layers, hidden), 0.05), vl=uni((num_layers, hidden), 0.5, 1.5),
        wlast=nrm((hidden, 3), 0.1), blast=nrm((3,), 0.05),
    )
    return raw


def _fuse_bn(g, be, m, v, b):
    s = g / jnp.sqrt(v + BN_EPS)          # BN scale
    t = (b - m) * s + be                  # bias + BN shift, scale-adjusted
    return s, t


def _pad_to(x, axis, size):
    pad = [(0, 0)] * x.ndim
    pad[axis] = (0, size - x.shape[axis])
    return jnp.pad(x, pad)


def stack_decoder_params(raw_list, hidden):
    """Fuse eval-mode BN, fold scales into weights, pad hidden to 128, stack P."""
    Hp = ((hidden + HID_PAD - 1) // HID_PAD) * HID_PAD

    w1s, s1s, t1s = [], [], []
    w2s, t2s, wls, tls, wlasts, blasts = [], [], [], [], [], []
    for raw in raw_list:
        s1, t1 = _fuse_bn(raw["g1"], raw["be1"], raw["m1"], raw["v1"], raw["b1"])
        s2, t2 = _fuse_bn(raw["g2"], raw["be2"], raw["m2"], raw["v2"], raw["b2"])
        sl, tl = _fuse_bn(raw["gl"], raw["bel"], raw["ml"], raw["vl"], raw["bl"])

        w1s.append(raw["w1"] * s1[None, :])            # f32, used in wrapper einsum
        s1s.append(s1)
        t1s.append(t1)

        # Padded hidden channels get zero weight + zero shift -> stay 0 after ReLU.
        w2s.append(_pad_to(raw["w2"] * s2[None, :], 1, Hp).astype(jnp.bfloat16))
        t2s.append(_pad_to(t2, 0, Hp)[None, :])                       # (1, Hp) f32

        wl_p = _pad_to(_pad_to(raw["wl"] * sl[:, None, :], 2, Hp), 1, Hp)
        wls.append(wl_p.astype(jnp.bfloat16))                          # (L, Hp, Hp)
        tls.append(_pad_to(tl, 1, Hp)[:, None, :])                     # (L, 1, Hp)

        wlast_p = _pad_to(_pad_to(raw["wlast"], 1, OUT_PAD), 0, Hp)    # (Hp, OUT_PAD)
        wlasts.append(wlast_p.astype(jnp.bfloat16))
        blasts.append(_pad_to(raw["blast"], 0, OUT_PAD)[None, :])      # (1, OUT_PAD)

    stk = lambda xs: jnp.stack(xs, axis=0)
    return dict(w1s=stk(w1s), s1=stk(s1s), t1=stk(t1s),
                w2=stk(w2s), t2=stk(t2s), wl=stk(wls), tl=stk(tls),
                wlast=stk(wlasts), blast=stk(blasts))


def decoder_reference(pts, latent, raw, num_layers):
    """Pure-JAX f32 reference for one primitive (matches PyTorch eval-mode BN)."""
    relu = lambda z: jnp.maximum(z, 0.0)
    bn = lambda z, g, be, m, v: (z - m) / jnp.sqrt(v + BN_EPS) * g + be
    h = pts[None] @ raw["w1"] + raw["b1"] + latent[:, None, :]
    h = relu(bn(h, raw["g1"], raw["be1"], raw["m1"], raw["v1"]))
    h = relu(bn(h @ raw["w2"] + raw["b2"], raw["g2"], raw["be2"], raw["m2"], raw["v2"]))
    for i in range(num_layers):
        h = relu(bn(h @ raw["wl"][i] + raw["bl"][i],
                    raw["gl"][i], raw["bel"][i], raw["ml"][i], raw["vl"][i]))
    return h @ raw["wlast"] + raw["blast"]


# ----------------------------------------------------------------------------
# Atlasnet forward
# ----------------------------------------------------------------------------
def atlasnet_forward(latent_vector, pts, template_points, stacked, opt,
                     only_first_primitive=True):
    latent_vector = latent_vector.reshape(-1, BOTTLENECK)

    if only_first_primitive:
        # The PyTorch forward returns only decoder[0]'s points; skip the dead
        # compute / HBM traffic of the other primitives (XLA cannot DCE part of
        # a single pallas_call output).
        template_points = template_points[:1]
        stacked = jax.tree_util.tree_map(lambda x: x[:1], stacked)

    # Hoisted batch-independent first matmul (tiny D contraction): (P, N, K)
    h1_pre = jnp.einsum("pnd,pdk->pnk", template_points,
                        stacked["w1s"]).astype(jnp.bfloat16)
    # Per-primitive affine on latent: lat*s1 + t1 -> (P, B, 1, K), consumed in-kernel.
    lat_c = (latent_vector[None, :, :] * stacked["s1"][:, None, :]
             + stacked["t1"][:, None, :])[:, :, None, :]

    out = atlasnet_decoders_pallas(h1_pre, lat_c, stacked, opt.num_layers)
    # (P, B, N, OUT_PAD) bf16; real channels are [..., :3].
    # (B, N, 3) == permute(0, 2, 1) of the PyTorch NCW (B, 3, N) conv output.
    final_points = out[0, :, :, :3].astype(jnp.float32)
    return final_points, pts


if __name__ == "__main__":
    opt = SimpleNamespace(
        nb_primitives=2,
        number_points=128,      # points per primitive (small)
        hidden_neurons=64,
        num_layers=2,
        dim_template=2,         # SQUARE template -> 2D points
        bottleneck_size=BOTTLENECK,
    )

    key = jax.random.PRNGKey(0)
    k_lat, k_pts, k_tmpl, k_par = jax.random.split(key, 4)

    B = 2
    latent_vector = jax.random.normal(k_lat, (B, BOTTLENECK), jnp.float32) * 0.5
    pts_passthrough = jax.random.normal(k_pts, (B, opt.number_points, 3), jnp.float32)

    # template.get_random_points -> torch.rand((1, dim, N)); stored channels-last (P, N, dim)
    tmpl_keys = jax.random.split(k_tmpl, opt.nb_primitives)
    template_points = jnp.stack([
        jnp.transpose(
            jax.random.uniform(tmpl_keys[i], (1, opt.dim_template, opt.number_points),
                               jnp.float32)[0], (1, 0))
        for i in range(opt.nb_primitives)], axis=0)                  # (P, N, D)

    par_keys = jax.random.split(k_par, opt.nb_primitives)
    decoder_raw = [init_decoder_params(par_keys[i], opt.dim_template,
                                       opt.bottleneck_size, opt.hidden_neurons,
                                       opt.num_layers)
                   for i in range(opt.nb_primitives)]
    decoder_stacked = stack_decoder_params(decoder_raw, opt.hidden_neurons)

    fwd = jax.jit(lambda lat, p: atlasnet_forward(lat, p, template_points,
                                                  decoder_stacked, opt))
    final_points, pts_out = fwd(latent_vector, pts_passthrough)
    final_points = jax.block_until_ready(final_points)

    # Correctness check vs. pure-JAX f32 reference (bf16 matmul operands in kernel)
    ref = decoder_reference(template_points[0], latent_vector, decoder_raw[0],
                            opt.num_layers)
    np.testing.assert_allclose(np.asarray(final_points), np.asarray(ref),
                               rtol=3e-2, atol=3e-2)
    assert final_points.shape == (B, opt.number_points, 3)
    np.testing.assert_array_equal(np.asarray(pts_out), np.asarray(pts_passthrough))

    print("KERNEL_OK")
</pallas_src>

<mosaic_0001>
module attributes {stable_mosaic.version = 11 : i64} {
  func.func @kernel(%arg0: i32, %arg1: i32, %arg2: i32, %arg3: memref<1x128x1024xbf16, #tpu.memory_space<vmem>>, %arg4: memref<1x1x1x1024xf32, #tpu.memory_space<vmem>>, %arg5: memref<1x1024x128xbf16, #tpu.memory_space<vmem>>, %arg6: memref<1x1x128xf32, #tpu.memory_space<vmem>>, %arg7: memref<1x2x128x128xbf16, #tpu.memory_space<vmem>>, %arg8: memref<1x2x1x128xf32, #tpu.memory_space<vmem>>, %arg9: memref<1x128x128xbf16, #tpu.memory_space<vmem>>, %arg10: memref<1x1x128xf32, #tpu.memory_space<vmem>>, %arg11: memref<1x1x128x128xbf16, #tpu.memory_space<vmem>>) attributes {dimension_semantics = [#tpu.dimension_semantics<parallel>, #tpu.dimension_semantics<parallel>, #tpu.dimension_semantics<parallel>], iteration_bounds = array<i64: 1, 1, 2>, scalar_prefetch = 0 : i64, scratch_operands = 0 : i64, tpu.core_type = #tpu.core_type<tc>, window_params = [{transform_indices = @transform_0, window_bounds = array<i64: 1, 128, 1024>}, {transform_indices = @transform_1, window_bounds = array<i64: 1, 1, 1, 1024>}, {transform_indices = @transform_2, window_bounds = array<i64: 1, 1024, 128>}, {transform_indices = @transform_3, window_bounds = array<i64: 1, 1, 128>}, {transform_indices = @transform_4, window_bounds = array<i64: 1, 2, 128, 128>}, {transform_indices = @transform_5, window_bounds = array<i64: 1, 2, 1, 128>}, {transform_indices = @transform_6, window_bounds = array<i64: 1, 128, 128>}, {transform_indices = @transform_7, window_bounds = array<i64: 1, 1, 128>}, {transform_indices = @transform_8, window_bounds = array<i64: 1, 1, 128, 128>}]} {
    %c0 = arith.constant 0 : index
    %c0_0 = arith.constant 0 : index
    %c0_1 = arith.constant 0 : index
    %0 = vector.load %arg3[%c0, %c0_0, %c0_1] : memref<1x128x1024xbf16, #tpu.memory_space<vmem>>, vector<1x128x1024xbf16>
    %1 = vector.shape_cast %0 : vector<1x128x1024xbf16> to vector<128x1024xbf16>
    %2 = arith.extf %1 : vector<128x1024xbf16> to vector<128x1024xf32>
    %c0_2 = arith.constant 0 : index
    %c0_3 = arith.constant 0 : index
    %c0_4 = arith.constant 0 : index
    %c0_5 = arith.constant 0 : index
    %3 = vector.load %arg4[%c0_2, %c0_3, %c0_4, %c0_5] : memref<1x1x1x1024xf32, #tpu.memory_space<vmem>>, vector<1x1x1x1024xf32>
    %4 = vector.shape_cast %3 : vector<1x1x1x1024xf32> to vector<1x1024xf32>
    %5 = vector.broadcast %4 : vector<1x1024xf32> to vector<128x1024xf32>
    %6 = arith.addf %2, %5 : vector<128x1024xf32>
    %cst = arith.constant 0.000000e+00 : f32
    %7 = vector.broadcast %cst : f32 to vector<128x1024xf32>
    %8 = arith.maximumf %6, %7 : vector<128x1024xf32>
    %9 = arith.truncf %8 : vector<128x1024xf32> to vector<128x1024xbf16>
    %c0_6 = arith.constant 0 : index
    %c0_7 = arith.constant 0 : index
    %c0_8 = arith.constant 0 : index
    %10 = vector.load %arg5[%c0_6, %c0_7, %c0_8] : memref<1x1024x128xbf16, #tpu.memory_space<vmem>>, vector<1x1024x128xbf16>
    %11 = vector.shape_cast %10 : vector<1x1024x128xbf16> to vector<1024x128xbf16>
    %cst_9 = arith.constant dense<0.000000e+00> : vector<128x128xf32>
    %12 = tpu.matmul %9, %11, %cst_9 {dimension_numbers = #tpu.dot_dimension_numbers<[1], [0], [0], [1], [0, 0, 1, 1], [], []>} : vector<128x1024xbf16>, vector<1024x128xbf16>, vector<128x128xf32> -> vector<128x128xf32>
    %c0_10 = arith.constant 0 : index
    %c0_11 = arith.constant 0 : index
    %c0_12 = arith.constant 0 : index
    %13 = vector.load %arg6[%c0_10, %c0_11, %c0_12] : memref<1x1x128xf32, #tpu.memory_space<vmem>>, vector<1x1x128xf32>
    %14 = vector.shape_cast %13 : vector<1x1x128xf32> to vector<1x128xf32>
    %15 = vector.broadcast %14 : vector<1x128xf32> to vector<128x128xf32>
    %16 = arith.addf %12, %15 : vector<128x128xf32>
    %cst_13 = arith.constant 0.000000e+00 : f32
    %17 = vector.broadcast %cst_13 : f32 to vector<128x128xf32>
    %18 = arith.maximumf %16, %17 : vector<128x128xf32>
    %19 = arith.truncf %18 : vector<128x128xf32> to vector<128x128xbf16>
    %c0_14 = arith.constant 0 : index
    %c0_15 = arith.constant 0 : index
    %c0_16 = arith.constant 0 : index
    %c0_17 = arith.constant 0 : index
    %20 = vector.load %arg7[%c0_14, %c0_15, %c0_16, %c0_17] : memref<1x2x128x128xbf16, #tpu.memory_space<vmem>>, vector<1x1x128x128xbf16>
    %21 = vector.shape_cast %20 : vector<1x1x128x128xbf16> to vector<128x128xbf16>
    %cst_18 = arith.constant dense<0.000000e+00> : vector<128x128xf32>
    %22 = tpu.matmul %19, %21, %cst_18 {dimension_numbers = #tpu.dot_dimension_numbers<[1], [0], [0], [1], [0, 0, 1, 1], [], []>} : vector<128x128xbf16>, vector<128x128xbf16>, vector<128x128xf32> -> vector<128x128xf32>
    %c0_19 = arith.constant 0 : index
    %c0_20 = arith.constant 0 : index
    %c0_21 = arith.constant 0 : index
    %c0_22 = arith.constant 0 : index
    %23 = vector.load %arg8[%c0_19, %c0_20, %c0_21, %c0_22] : memref<1x2x1x128xf32, #tpu.memory_space<vmem>>, vector<1x1x1x128xf32>
    %24 = vector.shape_cast %23 : vector<1x1x1x128xf32> to vector<1x128xf32>
    %25 = vector.broadcast %24 : vector<1x128xf32> to vector<128x128xf32>
    %26 = arith.addf %22, %25 : vector<128x128xf32>
    %cst_23 = arith.constant 0.000000e+00 : f32
    %27 = vector.broadcast %cst_23 : f32 to vector<128x128xf32>
    %28 = arith.maximumf %26, %27 : vector<128x128xf32>
    %29 = arith.truncf %28 : vector<128x128xf32> to vector<128x128xbf16>
    %c0_24 = arith.constant 0 : index
    %c1 = arith.constant 1 : index
    %c0_25 = arith.constant 0 : index
    %c0_26 = arith.constant 0 : index
    %30 = vector.load %arg7[%c0_24, %c1, %c0_25, %c0_26] : memref<1x2x128x128xbf16, #tpu.memory_space<vmem>>, vector<1x1x128x128xbf16>
    %31 = vector.shape_cast %30 : vector<1x1x128x128xbf16> to vector<128x128xbf16>
    %cst_27 = arith.constant dense<0.000000e+00> : vector<128x128xf32>
    %32 = tpu.matmul %29, %31, %cst_27 {dimension_numbers = #tpu.dot_dimension_numbers<[1], [0], [0], [1], [0, 0, 1, 1], [], []>} : vector<128x128xbf16>, vector<128x128xbf16>, vector<128x128xf32> -> vector<128x128xf32>
    %c0_28 = arith.constant 0 : index
    %c1_29 = arith.constant 1 : index
    %c0_30 = arith.constant 0 : index
    %c0_31 = arith.constant 0 : index
    %33 = vector.load %arg8[%c0_28, %c1_29, %c0_30, %c0_31] : memref<1x2x1x128xf32, #tpu.memory_space<vmem>>, vector<1x1x1x128xf32>
    %34 = vector.shape_cast %33 : vector<1x1x1x128xf32> to vector<1x128xf32>
    %35 = vector.broadcast %34 : vector<1x128xf32> to vector<128x128xf32>
    %36 = arith.addf %32, %35 : vector<128x128xf32>
    %cst_32 = arith.constant 0.000000e+00 : f32
    %37 = vector.broadcast %cst_32 : f32 to vector<128x128xf32>
    %38 = arith.maximumf %36, %37 : vector<128x128xf32>
    %39 = arith.truncf %38 : vector<128x128xf32> to vector<128x128xbf16>
    %c0_33 = arith.constant 0 : index
    %c0_34 = arith.constant 0 : index
    %c0_35 = arith.constant 0 : index
    %40 = vector.load %arg9[%c0_33, %c0_34, %c0_35] : memref<1x128x128xbf16, #tpu.memory_space<vmem>>, vector<1x128x128xbf16>
    %41 = vector.shape_cast %40 : vector<1x128x128xbf16> to vector<128x128xbf16>
    %cst_36 = arith.constant dense<0.000000e+00> : vector<128x128xf32>
    %42 = tpu.matmul %39, %41, %cst_36 {dimension_numbers = #tpu.dot_dimension_numbers<[1], [0], [0], [1], [0, 0, 1, 1], [], []>} : vector<128x128xbf16>, vector<128x128xbf16>, vector<128x128xf32> -> vector<128x128xf32>
    %c0_37 = arith.constant 0 : index
    %c0_38 = arith.constant 0 : index
    %c0_39 = arith.constant 0 : index
    %43 = vector.load %arg10[%c0_37, %c0_38, %c0_39] : memref<1x1x128xf32, #tpu.memory_space<vmem>>, vector<1x1x128xf32>
    %44 = vector.shape_cast %43 : vector<1x1x128xf32> to vector<1x128xf32>
    %45 = vector.broadcast %44 : vector<1x128xf32> to vector<128x128xf32>
    %46 = arith.addf %42, %45 : vector<128x128xf32>
    %47 = arith.truncf %46 : vector<128x128xf32> to vector<128x128xbf16>
    %c0_40 = arith.constant 0 : index
    %c0_41 = arith.constant 0 : index
    %c0_42 = arith.constant 0 : index
    %c0_43 = arith.constant 0 : index
    %48 = vector.load %arg11[%c0_40, %c0_41, %c0_42, %c0_43] : memref<1x1x128x128xbf16, #tpu.memory_space<vmem>>, vector<1x1x128x128xbf16>
    %49 = vector.shape_cast %48 : vector<1x1x128x128xbf16> to vector<128x128xbf16>
    %50 = vector.shape_cast %47 : vector<128x128xbf16> to vector<1x1x128x128xbf16>
    tpu.vector_store %arg11[%c0_40, %c0_41, %c0_42, %c0_43], %50 {strides = array<i32>} : memref<1x1x128x128xbf16, #tpu.memory_space<vmem>>, vector<1x1x128x128xbf16>,
    return
  }
  func.func @transform_0(%arg0: i32, %arg1: i32, %arg2: i32) -> (i32, i32, i32) {
    %c0_i32 = arith.constant 0 : i32
    %c0_i32_0 = arith.constant 0 : i32
    return %arg0, %arg1, %c0_i32 : i32, i32, i32
  }
  func.func @transform_1(%arg0: i32, %arg1: i32, %arg2: i32) -> (i32, i32, i32, i32) {
    %c0_i32 = arith.constant 0 : i32
    %c0_i32_0 = arith.constant 0 : i32
    %c0_i32_1 = arith.constant 0 : i32
    return %arg0, %arg2, %c0_i32, %c0_i32_0 : i32, i32, i32, i32
  }
  func.func @transform_2(%arg0: i32, %arg1: i32, %arg2: i32) -> (i32, i32, i32) {
    %c0_i32 = arith.constant 0 : i32
    %c0_i32_0 = arith.constant 0 : i32
    %c0_i32_1 = arith.constant 0 : i32
    return %arg0, %c0_i32, %c0_i32_0 : i32, i32, i32
  }
  func.func @transform_3(%arg0: i32, %arg1: i32, %arg2: i32) -> (i32, i32, i32) {
    %c0_i32 = arith.constant 0 : i32
    %c0_i32_0 = arith.constant 0 : i32
    %c0_i32_1 = arith.constant 0 : i32
    return %arg0, %c0_i32, %c0_i32_0 : i32, i32, i32
  }
  func.func @transform_4(%arg0: i32, %arg1: i32, %arg2: i32) -> (i32, i32, i32, i32) {
    %c0_i32 = arith.constant 0 : i32
    %c0_i32_0 = arith.constant 0 : i32
    %c0_i32_1 = arith.constant 0 : i32
    %c0_i32_2 = arith.constant 0 : i32
    return %arg0, %c0_i32, %c0_i32_0, %c0_i32_1 : i32, i32, i32, i32
  }
  func.func @transform_5(%arg0: i32, %arg1: i32, %arg2: i32) -> (i32, i32, i32, i32) {
    %c0_i32 = arith.constant 0 : i32
    %c0_i32_0 = arith.constant 0 : i32
    %c0_i32_1 = arith.constant 0 : i32
    %c0_i32_2 = arith.constant 0 : i32
    return %arg0, %c0_i32, %c0_i32_0, %c0_i32_1 : i32, i32, i32, i32
  }
  func.func @transform_6(%arg0: i32, %arg1: i32, %arg2: i32) -> (i32, i32, i32) {
    %c0_i32 = arith.constant 0 : i32
    %c0_i32_0 = arith.constant 0 : i32
    %c0_i32_1 = arith.constant 0 : i32
    return %arg0, %c0_i32, %c0_i32_0 : i32, i32, i32
  }
  func.func @transform_7(%arg0: i32, %arg1: i32, %arg2: i32) -> (i32, i32, i32) {
    %c0_i32 = arith.constant 0 : i32
    %c0_i32_0 = arith.constant 0 : i32
    %c0_i32_1 = arith.constant 0 : i32
    return %arg0, %c0_i32, %c0_i32_0 : i32, i32, i32
  }
  func.func @transform_8(%arg0: i32, %arg1: i32, %arg2: i32) -> (i32, i32, i32, i32) {
    %c0_i32 = arith.constant 0 : i32
    %c0_i32_0 = arith.constant 0 : i32
    return %arg0, %arg2, %arg1, %c0_i32 : i32, i32, i32, i32
  }
}

</mosaic_0001>

<llo_original>
// kernel: _lambda_.1
$region0: #{_lambda_.1}
  #allocation0 [shape = 'u32[]', space=smem, size = 0x4, offset = 0x4, fixed_abs, tag = 'smem constant byte address 0x4 - core index']
  #allocation1 [shape = 'u32[144,128]{1,0:T(1,128)}', space=vmem, size = 0x12000, scoped, tag = 'internal scratch']
  %s0 = inlined_call_operand.vmem [shape: bf16[1,128,1024], index: 0, kind: input, shape index: {}]
  %s1 = inlined_call_operand.vmem [shape: f32[1,2,1,1024], index: 1, kind: input, shape index: {}]
  %s2 = inlined_call_operand.vmem [shape: bf16[1,1024,128], index: 2, kind: input, shape index: {}]
  %s3 = inlined_call_operand.vmem [shape: f32[1,1,128], index: 3, kind: input, shape index: {}]
  %s4 = inlined_call_operand.vmem [shape: bf16[1,2,128,128], index: 4, kind: input, shape index: {}]
  %s5 = inlined_call_operand.vmem [shape: f32[1,2,1,128], index: 5, kind: input, shape index: {}]
  %s6 = inlined_call_operand.vmem [shape: bf16[1,128,128], index: 6, kind: input, shape index: {}]
  %s7 = inlined_call_operand.vmem [shape: f32[1,1,128], index: 7, kind: input, shape index: {}]
  %s8 = inlined_call_operand.vmem [shape: bf16[1,2,128,128], index: 8, kind: output, shape index: {}]
  %s9 = sld [smem:[#allocation0]]
  $region65: #{_lambda_.1} parent=0
    _
  %s11 = ssub.s32 1, %s9
  %s12 = scalar_select 0, %s11, %s9
  loop: start=0, step=1, limit=4
  $region2: #{_lambda_.1} parent=0 // loop_pre_header
    _
  $region3: #{_lambda_.1} parent=0 // loop_header
    %s14 = sphi 0, %s18
    %p15 = scmp.ge.s32.totalorder %s14, 4
    %s21 = sphi 0, %s40
    %s22 = sphi 0, %s36
    %s23 = sphi 0, %s32
    %s24 = sphi 0, %s21
    %s25 = sphi 0, %s22
    %s26 = sphi 0, %s23
    %s27 = sphi 0, %s24
    %s28 = sphi 0, %s25
    %s29 = sphi 0, %s26
    %s45 = sphi 0, %s47
    %s48 = sphi 0, %s45
    %s49 = sphi 0, %s48
    %s65 = sphi 0, %s49
    %s73 = sphi 0, %s75
    %s76 = sphi 0, %s73
    %s77 = sphi 0, %s76
    %s93 = sphi 0, %s77
    %s99 = sphi 0, %s101
    %s102 = sphi 0, %s99
    %s103 = sphi 0, %s102
    %s119 = sphi 0, %s103
    %s125 = sphi 0, %s127
    %s128 = sphi 0, %s125
    %s129 = sphi 0, %s128
    %s145 = sphi 0, %s129
    %s151 = sphi 0, %s153
    %s154 = sphi 0, %s151
    %s155 = sphi 0, %s154
    %s171 = sphi 0, %s155
    %s177 = sphi 0, %s179
    %s180 = sphi 0, %s177
    %s181 = sphi 0, %s180
    %s197 = sphi 0, %s181
    %s203 = sphi 0, %s205
    %s206 = sphi 0, %s203
    %s207 = sphi 0, %s206
    %s223 = sphi 0, %s207
    %s229 = sphi 0, %s231
    %s232 = sphi 0, %s229
    %s233 = sphi 0, %s232
    %s249 = sphi 0, %s233
    %s259 = sphi 0, %s261
    %s262 = sphi 0, %s259
    %s263 = sphi 0, %s262
    %s279 = sphi 0, %s263
  $region4: #{_lambda_.1} parent=0 // loop_header_branch
    %17 = sbr.rel (%p15) target = $region8
  $region5: #{_lambda_.1} parent=0 // loop_body
    %s19 = ssub.s32 %s14, 1
    %s20 = ssub.s32 %s14, 2
    %s30 = sadd.s32 1, %s23
    %p31 = scmp.ge.s32.totalorder %s30, 2
    %s32 = scalar_select %p31, 0, %s30
    %s33 = sadd.s32 1, %s22
    %s34 = scalar_select %p31, %s33, %s22
    %p35 = scmp.ge.s32.totalorder %s34, 1
    %s36 = scalar_select %p35, 0, %s34
    %s37 = sadd.s32 1, %s21
    %s38 = scalar_select %p35, %s37, %s21
    %p39 = scmp.ge.s32.totalorder %s38, 1
    %s40 = scalar_select %p39, 0, %s38
    %s41 = ssub.s32 %s21, %s40
    %s42 = ssub.s32 %s22, %s36
    %s43 = sor.u32 %s41, %s42
    %p44 = scmp.eq.s32.totalorder %s43, 0
    %s46 = sadd.s32 %s45, 1
    %s47 = scalar_select %p44, %s45, %s46
    %p50 = pneg %p44
    %p51 = scmp.eq.s32.totalorder %s14, 1
    %p52 = por %p50, %p51
    %p53 = scmp.ne.s32.totalorder %s45, %s48
    %p54 = scmp.eq.s32.totalorder %s14, 0
    %p55 = por %p53, %p54
    %p56 = scmp.ne.s32.totalorder %s45, %s48
    %p57 = scmp.eq.s32.totalorder %s19, 1
    %p58 = por %p56, %p57
    %p59 = scmp.ne.s32.totalorder %s48, %s49
    %p60 = scmp.eq.s32.totalorder %s19, 0
    %p61 = por %p59, %p60
    %p62 = scmp.ne.s32.totalorder %s48, %s49
    %p63 = scmp.eq.s32.totalorder %s20, 1
    %p64 = por %p62, %p63
    %p66 = scmp.ne.s32.totalorder %s49, %s65
    %p67 = scmp.eq.s32.totalorder %s20, 0
    %p68 = por %p66, %p67
    %s69 = ssub.s32 %s21, %s40
    %s70 = ssub.s32 %s23, %s32
    %s71 = sor.u32 %s69, %s70
    %p72 = scmp.eq.s32.totalorder %s71, 0
    %s74 = sadd.s32 %s73, 1
    %s75 = scalar_select %p72, %s73, %s74
    %p78 = pneg %p72
    %p79 = scmp.eq.s32.totalorder %s14, 1
    %p80 = por %p78, %p79
    %p81 = scmp.ne.s32.totalorder %s73, %s76
    %p82 = scmp.eq.s32.totalorder %s14, 0
    %p83 = por %p81, %p82
    %p84 = scmp.ne.s32.totalorder %s73, %s76
    %p85 = scmp.eq.s32.totalorder %s19, 1
    %p86 = por %p84, %p85
    %p87 = scmp.ne.s32.totalorder %s76, %s77
    %p88 = scmp.eq.s32.totalorder %s19, 0
    %p89 = por %p87, %p88
    %p90 = scmp.ne.s32.totalorder %s76, %s77
    %p91 = scmp.eq.s32.totalorder %s20, 1
    %p92 = por %p90, %p91
    %p94 = scmp.ne.s32.totalorder %s77, %s93
    %p95 = scmp.eq.s32.totalorder %s20, 0
    %p96 = por %p94, %p95
    %s97 = ssub.s32 %s21, %s40
    %p98 = scmp.eq.s32.totalorder %s97, 0
    %s100 = sadd.s32 %s99, 1
    %s101 = scalar_select %p98, %s99, %s100
    %p104 = pneg %p98
    %p105 = scmp.eq.s32.totalorder %s14, 1
    %p106 = por %p104, %p105
    %p107 = scmp.ne.s32.totalorder %s99, %s102
    %p108 = scmp.eq.s32.totalorder %s14, 0
    %p109 = por %p107, %p108
    %p110 = scmp.ne.s32.totalorder %s99, %s102
    %p111 = scmp.eq.s32.totalorder %s19, 1
    %p112 = por %p110, %p111
    %p113 = scmp.ne.s32.totalorder %s102, %s103
    %p114 = scmp.eq.s32.totalorder %s19, 0
    %p115 = por %p113, %p114
    %p116 = scmp.ne.s32.totalorder %s102, %s103
    %p117 = scmp.eq.s32.totalorder %s20, 1
    %p118 = por %p116, %p117
    %p120 = scmp.ne.s32.totalorder %s103, %s119
    %p121 = scmp.eq.s32.totalorder %s20, 0
    %p122 = por %p120, %p121
    %s123 = ssub.s32 %s21, %s40
    %p124 = scmp.eq.s32.totalorder %s123, 0
    %s126 = sadd.s32 %s125, 1
    %s127 = scalar_select %p124, %s125, %s126
    %p130 = pneg %p124
    %p131 = scmp.eq.s32.totalorder %s14, 1
    %p132 = por %p130, %p131
    %p133 = scmp.ne.s32.totalorder %s125, %s128
    %p134 = scmp.eq.s32.totalorder %s14, 0
    %p135 = por %p133, %p134
    %p136 = scmp.ne.s32.totalorder %s125, %s128
    %p137 = scmp.eq.s32.totalorder %s19, 1
    %p138 = por %p136, %p137
    %p139 = scmp.ne.s32.totalorder %s128, %s129
    %p140 = scmp.eq.s32.totalorder %s19, 0
    %p141 = por %p139, %p140
    %p142 = scmp.ne.s32.totalorder %s128, %s129
    %p143 = scmp.eq.s32.totalorder %s20, 1
    %p144 = por %p142, %p143
    %p146 = scmp.ne.s32.totalorder %s129, %s145
    %p147 = scmp.eq.s32.totalorder %s20, 0
    %p148 = por %p146, %p147
    %s149 = ssub.s32 %s21, %s40
    %p150 = scmp.eq.s32.totalorder %s149, 0
    %s152 = sadd.s32 %s151, 1
    %s153 = scalar_select %p150, %s151, %s152
    %p156 = pneg %p150
    %p157 = scmp.eq.s32.totalorder %s14, 1
    %p158 = por %p156, %p157
    %p159 = scmp.ne.s32.totalorder %s151, %s154
    %p160 = scmp.eq.s32.totalorder %s14, 0
    %p161 = por %p159, %p160
    %p162 = scmp.ne.s32.totalorder %s151, %s154
    %p163 = scmp.eq.s32.totalorder %s19, 1
    %p164 = por %p162, %p163
    %p165 = scmp.ne.s32.totalorder %s154, %s155
    %p166 = scmp.eq.s32.totalorder %s19, 0
    %p167 = por %p165, %p166
    %p168 = scmp.ne.s32.totalorder %s154, %s155
    %p169 = scmp.eq.s32.totalorder %s20, 1
    %p170 = por %p168, %p169
    %p172 = scmp.ne.s32.totalorder %s155, %s171
    %p173 = scmp.eq.s32.totalorder %s20, 0
    %p174 = por %p172, %p173
    %s175 = ssub.s32 %s21, %s40
    %p176 = scmp.eq.s32.totalorder %s175, 0
    %s178 = sadd.s32 %s177, 1
    %s179 = scalar_select %p176, %s177, %s178
    %p182 = pneg %p176
    %p183 = scmp.eq.s32.totalorder %s14, 1
    %p184 = por %p182, %p183
    %p185 = scmp.ne.s32.totalorder %s177, %s180
    %p186 = scmp.eq.s32.totalorder %s14, 0
    %p187 = por %p185, %p186
    %p188 = scmp.ne.s32.totalorder %s177, %s180
    %p189 = scmp.eq.s32.totalorder %s19, 1
    %p190 = por %p188, %p189
    %p191 = scmp.ne.s32.totalorder %s180, %s181
    %p192 = scmp.eq.s32.totalorder %s19, 0
    %p193 = por %p191, %p192
    %p194 = scmp.ne.s32.totalorder %s180, %s181
    %p195 = scmp.eq.s32.totalorder %s20, 1
    %p196 = por %p194, %p195
    %p198 = scmp.ne.s32.totalorder %s181, %s197
    %p199 = scmp.eq.s32.totalorder %s20, 0
    %p200 = por %p198, %p199
    %s201 = ssub.s32 %s21, %s40
    %p202 = scmp.eq.s32.totalorder %s201, 0
    %s204 = sadd.s32 %s203, 1
    %s205 = scalar_select %p202, %s203, %s204
    %p208 = pneg %p202
    %p209 = scmp.eq.s32.totalorder %s14, 1
    %p210 = por %p208, %p209
    %p211 = scmp.ne.s32.totalorder %s203, %s206
    %p212 = scmp.eq.s32.totalorder %s14, 0
    %p213 = por %p211, %p212
    %p214 = scmp.ne.s32.totalorder %s203, %s206
    %p215 = scmp.eq.s32.totalorder %s19, 1
    %p216 = por %p214, %p215
    %p217 = scmp.ne.s32.totalorder %s206, %s207
    %p218 = scmp.eq.s32.totalorder %s19, 0
    %p219 = por %p217, %p218
    %p220 = scmp.ne.s32.totalorder %s206, %s207
    %p221 = scmp.eq.s32.totalorder %s20, 1
    %p222 = por %p220, %p221
    %p224 = scmp.ne.s32.totalorder %s207, %s223
    %p225 = scmp.eq.s32.totalorder %s20, 0
    %p226 = por %p224, %p225
    %s227 = ssub.s32 %s21, %s40
    %p228 = scmp.eq.s32.totalorder %s227, 0
    %s230 = sadd.s32 %s229, 1
    %s231 = scalar_select %p228, %s229, %s230
    %p234 = pneg %p228
    %p235 = scmp.eq.s32.totalorder %s14, 1
    %p236 = por %p234, %p235
    %p237 = scmp.ne.s32.totalorder %s229, %s232
    %p238 = scmp.eq.s32.totalorder %s14, 0
    %p239 = por %p237, %p238
    %p240 = scmp.ne.s32.totalorder %s229, %s232
    %p241 = scmp.eq.s32.totalorder %s19, 1
    %p242 = por %p240, %p241
    %p243 = scmp.ne.s32.totalorder %s232, %s233
    %p244 = scmp.eq.s32.totalorder %s19, 0
    %p245 = por %p243, %p244
    %p246 = scmp.ne.s32.totalorder %s232, %s233
    %p247 = scmp.eq.s32.totalorder %s20, 1
    %p248 = por %p246, %p247
    %p250 = scmp.ne.s32.totalorder %s233, %s249
    %p251 = scmp.eq.s32.totalorder %s20, 0
    %p252 = por %p250, %p251
    %s253 = ssub.s32 %s21, %s40
    %s254 = ssub.s32 %s23, %s32
    %s255 = sor.u32 %s253, %s254
    %s256 = ssub.s32 %s22, %s36
    %s257 = sor.u32 %s255, %s256
    %p258 = scmp.eq.s32.totalorder %s257, 0
    %s260 = sadd.s32 %s259, 1
    %s261 = scalar_select %p258, %s259, %s260
    %p264 = pneg %p258
    %p265 = scmp.eq.s32.totalorder %s14, 1
    %p266 = por %p264, %p265
    %p267 = scmp.ne.s32.totalorder %s259, %s262
    %p268 = scmp.eq.s32.totalorder %s14, 0
    %p269 = por %p267, %p268
    %p270 = scmp.ne.s32.totalorder %s259, %s262
    %p271 = scmp.eq.s32.totalorder %s19, 1
    %p272 = por %p270, %p271
    %p273 = scmp.ne.s32.totalorder %s262, %s263
    %p274 = scmp.eq.s32.totalorder %s19, 0
    %p275 = por %p273, %p274
    %p276 = scmp.ne.s32.totalorder %s262, %s263
    %p277 = scmp.eq.s32.totalorder %s20, 1
    %p278 = por %p276, %p277
    %p280 = scmp.ne.s32.totalorder %s263, %s279
    %p281 = scmp.eq.s32.totalorder %s20, 0
    %p282 = por %p280, %p281
    %p283 = scmp.le.s32.totalorder 1, %s14
    %p284 = scmp.lt.s32.totalorder %s14, 3
    %p285 = pnand %p283, %p284
    %p286 = pneg %p285
    // Predicated region
    $region9: #{_lambda_.1} parent=5 // pred_check
      _
    $region10: #{_lambda_.1} parent=5 // pred_check_branch
      %288 = sbr.rel (%p285) target = $region12
    $region11: #{_lambda_.1} parent=5 // pred_region
      %s289 = ssub.s32 %s14, 1
      // Predicated region
      $region13: #{_lambda_.1} parent=11 // pred_check
        %p290 = pneg %p61
      $region14: #{_lambda_.1} parent=11 // pred_check_branch
        %292 = sbr.rel (%p290) target = $region16
      $region15: #{_lambda_.1} parent=11 // pred_region
        %s293 = smul.u32 16, %s25
        %p294 = scmp.lt.s32.totalorder %s24, 0
        %s295 = scalar_select %p294, %s24, 0
        %p296 = scmp.lt.s32.totalorder %s293, 15
        %s297 = scalar_select %p296, %s293, 15
        %s298 = smul.addr %s297, 8
        %s299 = smul.addr %s295, 128
        %s300 = sadd.s32 %s298, %s299
        %s301 = smul.addr %s300, 4
        %s302 = scalar_lea.vmem %s0, %s301
        %s303 = smul.u32 16, %s25
      $region16: #{_lambda_.1} parent=11 // pred_fallthru
        _
      // Predicated region
      $region17: #{_lambda_.1} parent=11 // pred_check
        %p304 = pneg %p115
      $region18: #{_lambda_.1} parent=11 // pred_check_branch
        %306 = sbr.rel (%p304) target = $region20
      $region19: #{_lambda_.1} parent=11 // pred_region
        %p307 = scmp.lt.s32.totalorder %s24, 0
        %s308 = scalar_select %p307, %s24, 0
        %s309 = smul.addr %s308, 128
        %s310 = smul.addr %s309, 4
        %s311 = scalar_lea.vmem %s2, %s310
      $region20: #{_lambda_.1} parent=11 // pred_fallthru
        _
      // Predicated region
      $region21: #{_lambda_.1} parent=11 // pred_check
        %p312 = pneg %p141
      $region22: #{_lambda_.1} parent=11 // pred_check_branch
        %314 = sbr.rel (%p312) target = $region24
      $region23: #{_lambda_.1} parent=11 // pred_region
        %p315 = scmp.lt.s32.totalorder %s24, 0
        %s316 = scalar_select %p315, %s24, 0
        %s317 = scalar_lea.vmem %s3, %s316
      $region24: #{_lambda_.1} parent=11 // pred_fallthru
        _
      // Predicated region
      $region25: #{_lambda_.1} parent=11 // pred_check
        %p318 = pneg %p167
      $region26: #{_lambda_.1} parent=11 // pred_check_branch
        %320 = sbr.rel (%p318) target = $region28
      $region27: #{_lambda_.1} parent=11 // pred_region
        %p321 = scmp.lt.s32.totalorder %s24, 0
        %s322 = scalar_select %p321, %s24, 0
        %s323 = smul.addr %s322, 32
        %s324 = smul.addr %s323, 4
        %s325 = scalar_lea.vmem %s4, %s324
      $region28: #{_lambda_.1} parent=11 // pred_fallthru
        _
      // Predicated region
      $region29: #{_lambda_.1} parent=11 // pred_check
        %p326 = pneg %p193
      $region30: #{_lambda_.1} parent=11 // pred_check_branch
        %328 = sbr.rel (%p326) target = $region32
      $region31: #{_lambda_.1} parent=11 // pred_region
        %p329 = scmp.lt.s32.totalorder %s24, 0
        %s330 = scalar_select %p329, %s24, 0
        %s331 = smul.addr %s330, 2
        %s332 = scalar_lea.vmem %s5, %s331
      $region32: #{_lambda_.1} parent=11 // pred_fallthru
        _
      // Predicated region
      $region33: #{_lambda_.1} parent=11 // pred_check
        %p333 = pneg %p219
      $region34: #{_lambda_.1} parent=11 // pred_check_branch
        %335 = sbr.rel (%p333) target = $region36
      $region35: #{_lambda_.1} parent=11 // pred_region
        %p336 = scmp.lt.s32.totalorder %s24, 0
        %s337 = scalar_select %p336, %s24, 0
        %s338 = smul.addr %s337, 16
        %s339 = smul.addr %s338, 4
        %s340 = scalar_lea.vmem %s6, %s339
      $region36: #{_lambda_.1} parent=11 // pred_fallthru
        _
      // Predicated region
      $region37: #{_lambda_.1} parent=11 // pred_check
        %p341 = pneg %p245
      $region38: #{_lambda_.1} parent=11 // pred_check_branch
        %343 = sbr.rel (%p341) target = $region40
      $region39: #{_lambda_.1} parent=11 // pred_region
        %p344 = scmp.lt.s32.totalorder %s24, 0
        %s345 = scalar_select %p344, %s24, 0
        %s346 = scalar_lea.vmem %s7, %s345
      $region40: #{_lambda_.1} parent=11 // pred_fallthru
        _
    $region12: #{_lambda_.1} parent=5 // pred_fallthru
      _
    %p347 = scmp.lt.s32.totalorder %s14, 2
    // Predicated region
    $region41: #{_lambda_.1} parent=5 // pred_check
      %p348 = pneg %p347
    $region42: #{_lambda_.1} parent=5 // pred_check_branch
      %350 = sbr.rel (%p348) target = $region44
    $region43: #{_lambda_.1} parent=5 // pred_region
      // Predicated region
      $region45: #{_lambda_.1} parent=43 // pred_check
        %p351 = pneg %p83
      $region46: #{_lambda_.1} parent=43 // pred_check_branch
        %353 = sbr.rel (%p351) target = $region48
      $region47: #{_lambda_.1} parent=43 // pred_region
        %p354 = scmp.lt.s32.totalorder %s21, 0
        %s355 = scalar_select %p354, %s21, 0
        %p356 = scmp.lt.s32.totalorder %s23, 1
        %s357 = scalar_select %p356, %s23, 1
        %s358 = smul.addr %s357, 8
        %s359 = smul.addr %s355, 16
        %s360 = sadd.s32 %s358, %s359
        %s361 = scalar_lea.vmem %s1, %s360
      $region48: #{_lambda_.1} parent=43 // pred_fallthru
        _
    $region44: #{_lambda_.1} parent=5 // pred_fallthru
      _
    %p362 = scmp.le.s32.totalorder 1, %s14
    %p363 = scmp.lt.s32.totalorder %s14, 3
    %p364 = pnand %p362, %p363
    %p365 = pneg %p364
    // Predicated region
    $region49: #{_lambda_.1} parent=5 // pred_check
      _
    $region50: #{_lambda_.1} parent=5 // pred_check_branch
      %367 = sbr.rel (%p364) target = $region52
    $region51: #{_lambda_.1} parent=5 // pred_region
      %s368 = ssub.s32 %s14, 1
      %s369 = smul.u32 16, %s25
      %p370 = scmp.lt.s32.totalorder %s24, 0
      %s371 = scalar_select %p370, %s24, 0
      %p372 = scmp.lt.s32.totalorder %s369, 15
      %s373 = scalar_select %p372, %s369, 15
      %s374 = smul.addr %s373, 8
      %s375 = smul.addr %s371, 128
      %s376 = sadd.s32 %s374, %s375
      %s377 = smul.addr %s376, 4
      %s378 = scalar_lea.vmem %s0, %s377
      %p379 = pneg %p61
      %p380 = pneg %p58
      %p381 = scmp.lt.s32.totalorder %s24, 0
      %s382 = scalar_select %p381, %s24, 0
      %p383 = scmp.lt.s32.totalorder %s26, 1
      %s384 = scalar_select %p383, %s26, 1
      %s385 = smul.addr %s384, 8
      %s386 = smul.addr %s382, 16
      %s387 = sadd.s32 %s385, %s386
      %s388 = scalar_lea.vmem %s1, %s387
      %p389 = pneg %p89
      %p390 = pneg %p86
      %p391 = scmp.lt.s32.totalorder %s24, 0
      %s392 = scalar_select %p391, %s24, 0
      %s393 = smul.addr %s392, 128
      %s394 = smul.addr %s393, 4
      %s395 = scalar_lea.vmem %s2, %s394
      %p396 = pneg %p115
      %p397 = pneg %p112
      %p398 = scmp.lt.s32.totalorder %s24, 0
      %s399 = scalar_select %p398, %s24, 0
      %s400 = scalar_lea.vmem %s3, %s399
      %p401 = pneg %p141
      %p402 = pneg %p138
      %p403 = scmp.lt.s32.totalorder %s24, 0
      %s404 = scalar_select %p403, %s24, 0
      %s405 = smul.addr %s404, 32
      %s406 = smul.addr %s405, 4
      %s407 = scalar_lea.vmem %s4, %s406
      %p408 = pneg %p167
      %p409 = pneg %p164
      %p410 = scmp.lt.s32.totalorder %s24, 0
      %s411 = scalar_select %p410, %s24, 0
      %s412 = smul.addr %s411, 2
      %s413 = scalar_lea.vmem %s5, %s412
      %p414 = pneg %p193
      %p415 = pneg %p190
      %p416 = scmp.lt.s32.totalorder %s24, 0
      %s417 = scalar_select %p416, %s24, 0
      %s418 = smul.addr %s417, 16
      %s419 = smul.addr %s418, 4
      %s420 = scalar_lea.vmem %s6, %s419
      %p421 = pneg %p219
      %p422 = pneg %p216
      %p423 = scmp.lt.s32.totalorder %s24, 0
      %s424 = scalar_select %p423, %s24, 0
      %s425 = scalar_lea.vmem %s7, %s424
      %p426 = pneg %p245
      %p427 = pneg %p242
      %p428 = pneg %p275
      %p429 = pneg %p272
      %s430 = smul.u32 16, %s25
      %p431 = scmp.lt.s32.totalorder %s24, 0
      %s432 = scalar_select %p431, %s24, 0
      %p433 = scmp.lt.s32.totalorder %s26, 1
      %s434 = scalar_select %p433, %s26, 1
      %p435 = scmp.lt.s32.totalorder %s430, 15
      %s436 = scalar_select %p435, %s430, 15
      %s437 = smul.addr %s434, 16
      %s438 = sadd.s32 %s436, %s437
      %s439 = smul.addr %s432, 32
      %s440 = sadd.s32 %s438, %s439
      %s441 = smul.addr %s440, 4
      %s442 = scalar_lea.vmem %s8, %s441
      %s443 = smul.u32 16, %s25
      %p444 = scmp.lt.s32.totalorder %s24, 0
      %s445 = scalar_select %p444, %s24, 0
      %p446 = scmp.lt.s32.totalorder %s443, 15
      %s447 = scalar_select %p446, %s443, 15
      %s448 = smul.addr %s447, 8
      %s449 = smul.addr %s445, 128
      %s450 = sadd.s32 %s448, %s449
      %s451 = smul.addr %s450, 4
      %s452 = scalar_lea.vmem %s0, %s451
      %s453 = smul.u32 16, %s25
      %p454 = scmp.lt.s32.totalorder %s24, 0
      %s455 = scalar_select %p454, %s24, 0
      %p456 = scmp.lt.s32.totalorder %s26, 1
      %s457 = scalar_select %p456, %s26, 1
      %s458 = smul.addr %s457, 8
      %s459 = smul.addr %s455, 16
      %s460 = sadd.s32 %s458, %s459
      %s461 = scalar_lea.vmem %s1, %s460
      %p462 = scmp.lt.s32.totalorder %s24, 0
      %s463 = scalar_select %p462, %s24, 0
      %s464 = smul.addr %s463, 128
      %s465 = smul.addr %s464, 4
      %s466 = scalar_lea.vmem %s2, %s465
      %p467 = scmp.lt.s32.totalorder %s24, 0
      %s468 = scalar_select %p467, %s24, 0
      %s469 = scalar_lea.vmem %s3, %s468
      %p470 = scmp.lt.s32.totalorder %s24, 0
      %s471 = scalar_select %p470, %s24, 0
      %s472 = smul.addr %s471, 32
      %s473 = smul.addr %s472, 4
      %s474 = scalar_lea.vmem %s4, %s473
      %p475 = scmp.lt.s32.totalorder %s24, 0
      %s476 = scalar_select %p475, %s24, 0
      %s477 = smul.addr %s476, 2
      %s478 = scalar_lea.vmem %s5, %s477
      %p479 = scmp.lt.s32.totalorder %s24, 0
      %s480 = scalar_select %p479, %s24, 0
      %s481 = smul.addr %s480, 16
      %s482 = smul.addr %s481, 4
      %s483 = scalar_lea.vmem %s6, %s482
      %p484 = scmp.lt.s32.totalorder %s24, 0
      %s485 = scalar_select %p484, %s24, 0
      %s486 = scalar_lea.vmem %s7, %s485
      %s487 = smul.u32 16, %s25
      %p488 = scmp.lt.s32.totalorder %s24, 0
      %s489 = scalar_select %p488, %s24, 0
      %p490 = scmp.lt.s32.totalorder %s26, 1
      %s491 = scalar_select %p490, %s26, 1
      %p492 = scmp.lt.s32.totalorder %s487, 15
      %s493 = scalar_select %p492, %s487, 15
      %s494 = smul.addr %s491, 16
      %s495 = sadd.s32 %s493, %s494
      %s496 = smul.addr %s489, 32
      %s497 = sadd.s32 %s495, %s496
      %s498 = smul.addr %s497, 4
      %s499 = scalar_lea.vmem %s8, %s498
      %s500 = smul.u32 16, %s25
      %v502 = vld [vmem:[%s452] sm:$0xff]
      %v503 = vld [vmem:[%s452 + $0x8] sm:$0xff]
      %v504 = vld [vmem:[%s452 + $0x10] sm:$0xff]
      %v505 = vld [vmem:[%s452 + $0x18] sm:$0xff]
      %v506 = vld [vmem:[%s452 + $0x20] sm:$0xff]
      %v507 = vld [vmem:[%s452 + $0x28] sm:$0xff]
      %v508 = vld [vmem:[%s452 + $0x30] sm:$0xff]
      %v509 = vld [vmem:[%s452 + $0x38] sm:$0xff]
      %v510 = vld [vmem:[%s452 + $0x40] sm:$0xff]
      %v511 = vld [vmem:[%s452 + $0x48] sm:$0xff]
      %v512 = vld [vmem:[%s452 + $0x50] sm:$0xff]
      %v513 = vld [vmem:[%s452 + $0x58] sm:$0xff]
      %v514 = vld [vmem:[%s452 + $0x60] sm:$0xff]
      %v515 = vld [vmem:[%s452 + $0x68] sm:$0xff]
      %v516 = vld [vmem:[%s452 + $0x70] sm:$0xff]
      %v517 = vld [vmem:[%s452 + $0x78] sm:$0xff]
      %v518 = vld [vmem:[%s452 + $0x80] sm:$0xff]
      %v519 = vld [vmem:[%s452 + $0x88] sm:$0xff]
      %v520 = vld [vmem:[%s452 + $0x90] sm:$0xff]
      %v521 = vld [vmem:[%s452 + $0x98] sm:$0xff]
      %v522 = vld [vmem:[%s452 + $0xa0] sm:$0xff]
      %v523 = vld [vmem:[%s452 + $0xa8] sm:$0xff]
      %v524 = vld [vmem:[%s452 + $0xb0] sm:$0xff]
      %v525 = vld [vmem:[%s452 + $0xb8] sm:$0xff]
      %v526 = vld [vmem:[%s452 + $0xc0] sm:$0xff]
      %v527 = vld [vmem:[%s452 + $0xc8] sm:$0xff]
      %v528 = vld [vmem:[%s452 + $0xd0] sm:$0xff]
      %v529 = vld [vmem:[%s452 + $0xd8] sm:$0xff]
      %v530 = vld [vmem:[%s452 + $0xe0] sm:$0xff]
      %v531 = vld [vmem:[%s452 + $0xe8] sm:$0xff]
      %v532 = vld [vmem:[%s452 + $0xf0] sm:$0xff]
      %v533 = vld [vmem:[%s452 + $0xf8] sm:$0xff]
      %v534 = vld [vmem:[%s452 + $0x100] sm:$0xff]
      %v535 = vld [vmem:[%s452 + $0x108] sm:$0xff]
      %v536 = vld [vmem:[%s452 + $0x110] sm:$0xff]
      %v537 = vld [vmem:[%s452 + $0x118] sm:$0xff]
      %v538 = vld [vmem:[%s452 + $0x120] sm:$0xff]
      %v539 = vld [vmem:[%s452 + $0x128] sm:$0xff]
      %v540 = vld [vmem:[%s452 + $0x130] sm:$0xff]
      %v541 = vld [vmem:[%s452 + $0x138] sm:$0xff]
      %v542 = vld [vmem:[%s452 + $0x140] sm:$0xff]
      %v543 = vld [vmem:[%s452 + $0x148] sm:$0xff]
      %v544 = vld [vmem:[%s452 + $0x150] sm:$0xff]
      %v545 = vld [vmem:[%s452 + $0x158] sm:$0xff]
      %v546 = vld [vmem:[%s452 + $0x160] sm:$0xff]
      %v547 = vld [vmem:[%s452 + $0x168] sm:$0xff]
      %v548 = vld [vmem:[%s452 + $0x170] sm:$0xff]
      %v549 = vld [vmem:[%s452 + $0x178] sm:$0xff]
      %v550 = vld [vmem:[%s452 + $0x180] sm:$0xff]
      %v551 = vld [vmem:[%s452 + $0x188] sm:$0xff]
      %v552 = vld [vmem:[%s452 + $0x190] sm:$0xff]
      %v553 = vld [vmem:[%s452 + $0x198] sm:$0xff]
      %v554 = vld [vmem:[%s452 + $0x1a0] sm:$0xff]
      %v555 = vld [vmem:[%s452 + $0x1a8] sm:$0xff]
      %v556 = vld [vmem:[%s452 + $0x1b0] sm:$0xff]
      %v557 = vld [vmem:[%s452 + $0x1b8] sm:$0xff]
      %v558 = vld [vmem:[%s452 + $0x1c0] sm:$0xff]
      %v559 = vld [vmem:[%s452 + $0x1c8] sm:$0xff]
      %v560 = vld [vmem:[%s452 + $0x1d0] sm:$0xff]
      %v561 = vld [vmem:[%s452 + $0x1d8] sm:$0xff]
      %v562 = vld [vmem:[%s452 + $0x1e0] sm:$0xff]
      %v563 = vld [vmem:[%s452 + $0x1e8] sm:$0xff]
      %v564 = vld [vmem:[%s452 + $0x1f0] sm:$0xff]
      %v565 = vld [vmem:[%s452 + $0x1f8] sm:$0xff]
      %v566 = vunpack.c.l.bf16 %v502
      %v567 = vunpack.c.h.bf16 %v502
      %v568 = vunpack.c.l.bf16 %v503
      %v569 = vunpack.c.h.bf16 %v503
      %v570 = vunpack.c.l.bf16 %v504
      %v571 = vunpack.c.h.bf16 %v504
      %v572 = vunpack.c.l.bf16 %v505
      %v573 = vunpack.c.h.bf16 %v505
      %v574 = vunpack.c.l.bf16 %v506
      %v575 = vunpack.c.h.bf16 %v506
      %v576 = vunpack.c.l.bf16 %v507
      %v577 = vunpack.c.h.bf16 %v507
      %v578 = vunpack.c.l.bf16 %v508
      %v579 = vunpack.c.h.bf16 %v508
      %v580 = vunpack.c.l.bf16 %v509
      %v581 = vunpack.c.h.bf16 %v509
      %v582 = vunpack.c.l.bf16 %v510
      %v583 = vunpack.c.h.bf16 %v510
      %v584 = vunpack.c.l.bf16 %v511
      %v585 = vunpack.c.h.bf16 %v511
      %v586 = vunpack.c.l.bf16 %v512
      %v587 = vunpack.c.h.bf16 %v512
      %v588 = vunpack.c.l.bf16 %v513
      %v589 = vunpack.c.h.bf16 %v513
      %v590 = vunpack.c.l.bf16 %v514
      %v591 = vunpack.c.h.bf16 %v514
      %v592 = vunpack.c.l.bf16 %v515
      %v593 = vunpack.c.h.bf16 %v515
      %v594 = vunpack.c.l.bf16 %v516
      %v595 = vunpack.c.h.bf16 %v516
      %v596 = vunpack.c.l.bf16 %v517
      %v597 = vunpack.c.h.bf16 %v517
      %v598 = vunpack.c.l.bf16 %v518
      %v599 = vunpack.c.h.bf16 %v518
      %v600 = vunpack.c.l.bf16 %v519
      %v601 = vunpack.c.h.bf16 %v519
      %v602 = vunpack.c.l.bf16 %v520
      %v603 = vunpack.c.h.bf16 %v520
      %v604 = vunpack.c.l.bf16 %v521
      %v605 = vunpack.c.h.bf16 %v521
      %v606 = vunpack.c.l.bf16 %v522
      %v607 = vunpack.c.h.bf16 %v522
      %v608 = vunpack.c.l.bf16 %v523
      %v609 = vunpack.c.h.bf16 %v523
      %v610 = vunpack.c.l.bf16 %v524
      %v611 = vunpack.c.h.bf16 %v524
      %v612 = vunpack.c.l.bf16 %v525
      %v613 = vunpack.c.h.bf16 %v525
      %v614 = vunpack.c.l.bf16 %v526
      %v615 = vunpack.c.h.bf16 %v526
      %v616 = vunpack.c.l.bf16 %v527
      %v617 = vunpack.c.h.bf16 %v527
      %v618 = vunpack.c.l.bf16 %v528
      %v619 = vunpack.c.h.bf16 %v528
      %v620 = vunpack.c.l.bf16 %v529
      %v621 = vunpack.c.h.bf16 %v529
      %v622 = vunpack.c.l.bf16 %v530
      %v623 = vunpack.c.h.bf16 %v530
      %v624 = vunpack.c.l.bf16 %v531
      %v625 = vunpack.c.h.bf16 %v531
      %v626 = vunpack.c.l.bf16 %v532
      %v627 = vunpack.c.h.bf16 %v532
      %v628 = vunpack.c.l.bf16 %v533
      %v629 = vunpack.c.h.bf16 %v533
      %v630 = vunpack.c.l.bf16 %v534
      %v631 = vunpack.c.h.bf16 %v534
      %v632 = vunpack.c.l.bf16 %v535
      %v633 = vunpack.c.h.bf16 %v535
      %v634 = vunpack.c.l.bf16 %v536
      %v635 = vunpack.c.h.bf16 %v536
      %v636 = vunpack.c.l.bf16 %v537
      %v637 = vunpack.c.h.bf16 %v537
      %v638 = vunpack.c.l.bf16 %v538
      %v639 = vunpack.c.h.bf16 %v538
      %v640 = vunpack.c.l.bf16 %v539
      %v641 = vunpack.c.h.bf16 %v539
      %v642 = vunpack.c.l.bf16 %v540
      %v643 = vunpack.c.h.bf16 %v540
      %v644 = vunpack.c.l.bf16 %v541
      %v645 = vunpack.c.h.bf16 %v541
      %v646 = vunpack.c.l.bf16 %v542
      %v647 = vunpack.c.h.bf16 %v542
      %v648 = vunpack.c.l.bf16 %v543
      %v649 = vunpack.c.h.bf16 %v543
      %v650 = vunpack.c.l.bf16 %v544
      %v651 = vunpack.c.h.bf16 %v544
      %v652 = vunpack.c.l.bf16 %v545
      %v653 = vunpack.c.h.bf16 %v545
      %v654 = vunpack.c.l.bf16 %v546
      %v655 = vunpack.c.h.bf16 %v546
      %v656 = vunpack.c.l.bf16 %v547
      %v657 = vunpack.c.h.bf16 %v547
      %v658 = vunpack.c.l.bf16 %v548
      %v659 = vunpack.c.h.bf16 %v548
      %v660 = vunpack.c.l.bf16 %v549
      %v661 = vunpack.c.h.bf16 %v549
      %v662 = vunpack.c.l.bf16 %v550
      %v663 = vunpack.c.h.bf16 %v550
      %v664 = vunpack.c.l.bf16 %v551
      %v665 = vunpack.c.h.bf16 %v551
      %v666 = vunpack.c.l.bf16 %v552
      %v667 = vunpack.c.h.bf16 %v552
      %v668 = vunpack.c.l.bf16 %v553
      %v669 = vunpack.c.h.bf16 %v553
      %v670 = vunpack.c.l.bf16 %v554
      %v671 = vunpack.c.h.bf16 %v554
      %v672 = vunpack.c.l.bf16 %v555
      %v673 = vunpack.c.h.bf16 %v555
      %v674 = vunpack.c.l.bf16 %v556
      %v675 = vunpack.c.h.bf16 %v556
      %v676 = vunpack.c.l.bf16 %v557
      %v677 = vunpack.c.h.bf16 %v557
      %v678 = vunpack.c.l.bf16 %v558
      %v679 = vunpack.c.h.bf16 %v558
      %v680 = vunpack.c.l.bf16 %v559
      %v681 = vunpack.c.h.bf16 %v559
      %v682 = vunpack.c.l.bf16 %v560
      %v683 = vunpack.c.h.bf16 %v560
      %v684 = vunpack.c.l.bf16 %v561
      %v685 = vunpack.c.h.bf16 %v561
      %v686 = vunpack.c.l.bf16 %v562
      %v687 = vunpack.c.h.bf16 %v562
      %v688 = vunpack.c.l.bf16 %v563
      %v689 = vunpack.c.h.bf16 %v563
      %v690 = vunpack.c.l.bf16 %v564
      %v691 = vunpack.c.h.bf16 %v564
      %v692 = vunpack.c.l.bf16 %v565
      %v693 = vunpack.c.h.bf16 %v565
      %v694 = vld [vmem:[%s461] sm:$0xff]
      %v696 = vlaneseq
      %v697 = vshrl.u32 %v696, 7
      %v698 = vsub.s32 0, %v697
      %v699 = vrot.slane %v694, %v698
      %v700 = vlaneseq
      %v701 = vshrl.u32 %v700, 7
      %v702 = vsub.s32 1, %v701
      %v703 = vrot.slane %v694, %v702
      %v704 = vlaneseq
      %v705 = vshrl.u32 %v704, 7
      %v706 = vsub.s32 2, %v705
      %v707 = vrot.slane %v694, %v706
      %v708 = vlaneseq
      %v709 = vshrl.u32 %v708, 7
      %v710 = vsub.s32 3, %v709
      %v711 = vrot.slane %v694, %v710
      %v712 = vlaneseq
      %v713 = vshrl.u32 %v712, 7
      %v714 = vsub.s32 4, %v713
      %v715 = vrot.slane %v694, %v714
      %v716 = vlaneseq
      %v717 = vshrl.u32 %v716, 7
      %v718 = vsub.s32 5, %v717
      %v719 = vrot.slane %v694, %v718
      %v720 = vlaneseq
      %v721 = vshrl.u32 %v720, 7
      %v722 = vsub.s32 6, %v721
      %v723 = vrot.slane %v694, %v722
      %v724 = vlaneseq
      %v725 = vshrl.u32 %v724, 7
      %v726 = vsub.s32 7, %v725
      %v727 = vrot.slane %v694, %v726
      %v736 = vadd.f32 %v566, %v699
      %v737 = vadd.f32 %v567, %v703
      %v738 = vadd.f32 %v568, %v707
      %v739 = vadd.f32 %v569, %v711
      %v740 = vadd.f32 %v570, %v715
      %v741 = vadd.f32 %v571, %v719
      %v742 = vadd.f32 %v572, %v723
      %v743 = vadd.f32 %v573, %v727
      %v744 = vadd.f32 %v574, %v699
      %v745 = vadd.f32 %v575, %v703
      %v746 = vadd.f32 %v576, %v707
      %v747 = vadd.f32 %v577, %v711
      %v748 = vadd.f32 %v578, %v715
      %v749 = vadd.f32 %v579, %v719
      %v750 = vadd.f32 %v580, %v723
      %v751 = vadd.f32 %v581, %v727
      %v752 = vadd.f32 %v582, %v699
      %v753 = vadd.f32 %v583, %v703
      %v754 = vadd.f32 %v584, %v707
      %v755 = vadd.f32 %v585, %v711
      %v756 = vadd.f32 %v586, %v715
      %v757 = vadd.f32 %v587, %v719
      %v758 = vadd.f32 %v588, %v723
      %v759 = vadd.f32 %v589, %v727
      %v760 = vadd.f32 %v590, %v699
      %v761 = vadd.f32 %v591, %v703
      %v762 = vadd.f32 %v592, %v707
      %v763 = vadd.f32 %v593, %v711
      %v764 = vadd.f32 %v594, %v715
      %v765 = vadd.f32 %v595, %v719
      %v766 = vadd.f32 %v596, %v723
      %v767 = vadd.f32 %v597, %v727
      %v768 = vadd.f32 %v598, %v699
      %v769 = vadd.f32 %v599, %v703
      %v770 = vadd.f32 %v600, %v707
      %v771 = vadd.f32 %v601, %v711
      %v772 = vadd.f32 %v602, %v715
      %v773 = vadd.f32 %v603, %v719
      %v774 = vadd.f32 %v604, %v723
      %v775 = vadd.f32 %v605, %v727
      %v776 = vadd.f32 %v606, %v699
      %v777 = vadd.f32 %v607, %v703
      %v778 = vadd.f32 %v608, %v707
      %v779 = vadd.f32 %v609, %v711
      %v780 = vadd.f32 %v610, %v715
      %v781 = vadd.f32 %v611, %v719
      %v782 = vadd.f32 %v612, %v723
      %v783 = vadd.f32 %v613, %v727
      %v784 = vadd.f32 %v614, %v699
      %v785 = vadd.f32 %v615, %v703
      %v786 = vadd.f32 %v616, %v707
      %v787 = vadd.f32 %v617, %v711
      %v788 = vadd.f32 %v618, %v715
      %v789 = vadd.f32 %v619, %v719
      %v790 = vadd.f32 %v620, %v723
      %v791 = vadd.f32 %v621, %v727
      %v792 = vadd.f32 %v622, %v699
      %v793 = vadd.f32 %v623, %v703
      %v794 = vadd.f32 %v624, %v707
      %v795 = vadd.f32 %v625, %v711
      %v796 = vadd.f32 %v626, %v715
      %v797 = vadd.f32 %v627, %v719
      %v798 = vadd.f32 %v628, %v723
      %v799 = vadd.f32 %v629, %v727
      %v800 = vadd.f32 %v630, %v699
      %v801 = vadd.f32 %v631, %v703
      %v802 = vadd.f32 %v632, %v707
      %v803 = vadd.f32 %v633, %v711
      %v804 = vadd.f32 %v634, %v715
      %v805 = vadd.f32 %v635, %v719
      %v806 = vadd.f32 %v636, %v723
      %v807 = vadd.f32 %v637, %v727
      %v808 = vadd.f32 %v638, %v699
      %v809 = vadd.f32 %v639, %v703
      %v810 = vadd.f32 %v640, %v707
      %v811 = vadd.f32 %v641, %v711
      %v812 = vadd.f32 %v642, %v715
      %v813 = vadd.f32 %v643, %v719
      %v814 = vadd.f32 %v644, %v723
      %v815 = vadd.f32 %v645, %v727
      %v816 = vadd.f32 %v646, %v699
      %v817 = vadd.f32 %v647, %v703
      %v818 = vadd.f32 %v648, %v707
      %v819 = vadd.f32 %v649, %v711
      %v820 = vadd.f32 %v650, %v715
      %v821 = vadd.f32 %v651, %v719
      %v822 = vadd.f32 %v652, %v723
      %v823 = vadd.f32 %v653, %v727
      %v824 = vadd.f32 %v654, %v699
      %v825 = vadd.f32 %v655, %v703
      %v826 = vadd.f32 %v656, %v707
      %v827 = vadd.f32 %v657, %v711
      %v828 = vadd.f32 %v658, %v715
      %v829 = vadd.f32 %v659, %v719
      %v830 = vadd.f32 %v660, %v723
      %v831 = vadd.f32 %v661, %v727
      %v832 = vadd.f32 %v662, %v699
      %v833 = vadd.f32 %v663, %v703
      %v834 = vadd.f32 %v664, %v707
      %v835 = vadd.f32 %v665, %v711
      %v836 = vadd.f32 %v666, %v715
      %v837 = vadd.f32 %v667, %v719
      %v838 = vadd.f32 %v668, %v723
      %v839 = vadd.f32 %v669, %v727
      %v840 = vadd.f32 %v670, %v699
      %v841 = vadd.f32 %v671, %v703
      %v842 = vadd.f32 %v672, %v707
      %v843 = vadd.f32 %v673, %v711
      %v844 = vadd.f32 %v674, %v715
      %v845 = vadd.f32 %v675, %v719
      %v846 = vadd.f32 %v676, %v723
      %v847 = vadd.f32 %v677, %v727
      %v848 = vadd.f32 %v678, %v699
      %v849 = vadd.f32 %v679, %v703
      %v850 = vadd.f32 %v680, %v707
      %v851 = vadd.f32 %v681, %v711
      %v852 = vadd.f32 %v682, %v715
      %v853 = vadd.f32 %v683, %v719
      %v854 = vadd.f32 %v684, %v723
      %v855 = vadd.f32 %v685, %v727
      %v856 = vadd.f32 %v686, %v699
      %v857 = vadd.f32 %v687, %v703
      %v858 = vadd.f32 %v688, %v707
      %v859 = vadd.f32 %v689, %v711
      %v860 = vadd.f32 %v690, %v715
      %v861 = vadd.f32 %v691, %v719
      %v862 = vadd.f32 %v692, %v723
      %v863 = vadd.f32 %v693, %v727
      %v864 = vmax.f32 %v736, 0.0
      %v865 = vmax.f32 %v737, 0.0
      %v866 = vmax.f32 %v738, 0.0
      %v867 = vmax.f32 %v739, 0.0
      %v868 = vmax.f32 %v740, 0.0
      %v869 = vmax.f32 %v741, 0.0
      %v870 = vmax.f32 %v742, 0.0
      %v871 = vmax.f32 %v743, 0.0
      %v872 = vmax.f32 %v744, 0.0
      %v873 = vmax.f32 %v745, 0.0
      %v874 = vmax.f32 %v746, 0.0
      %v875 = vmax.f32 %v747, 0.0
      %v876 = vmax.f32 %v748, 0.0
      %v877 = vmax.f32 %v749, 0.0
      %v878 = vmax.f32 %v750, 0.0
      %v879 = vmax.f32 %v751, 0.0
      %v880 = vmax.f32 %v752, 0.0
      %v881 = vmax.f32 %v753, 0.0
      %v882 = vmax.f32 %v754, 0.0
      %v883 = vmax.f32 %v755, 0.0
      %v884 = vmax.f32 %v756, 0.0
      %v885 = vmax.f32 %v757, 0.0
      %v886 = vmax.f32 %v758, 0.0
      %v887 = vmax.f32 %v759, 0.0
      %v888 = vmax.f32 %v760, 0.0
      %v889 = vmax.f32 %v761, 0.0
      %v890 = vmax.f32 %v762, 0.0
      %v891 = vmax.f32 %v763, 0.0
      %v892 = vmax.f32 %v764, 0.0
      %v893 = vmax.f32 %v765, 0.0
      %v894 = vmax.f32 %v766, 0.0
      %v895 = vmax.f32 %v767, 0.0
      %v896 = vmax.f32 %v768, 0.0
      %v897 = vmax.f32 %v769, 0.0
      %v898 = vmax.f32 %v770, 0.0
      %v899 = vmax.f32 %v771, 0.0
      %v900 = vmax.f32 %v772, 0.0
      %v901 = vmax.f32 %v773, 0.0
      %v902 = vmax.f32 %v774, 0.0
      %v903 = vmax.f32 %v775, 0.0
      %v904 = vmax.f32 %v776, 0.0
      %v905 = vmax.f32 %v777, 0.0
      %v906 = vmax.f32 %v778, 0.0
      %v907 = vmax.f32 %v779, 0.0
      %v908 = vmax.f32 %v780, 0.0
      %v909 = vmax.f32 %v781, 0.0
      %v910 = vmax.f32 %v782, 0.0
      %v911 = vmax.f32 %v783, 0.0
      %v912 = vmax.f32 %v784, 0.0
      %v913 = vmax.f32 %v785, 0.0
      %v914 = vmax.f32 %v786, 0.0
      %v915 = vmax.f32 %v787, 0.0
      %v916 = vmax.f32 %v788, 0.0
      %v917 = vmax.f32 %v789, 0.0
      %v918 = vmax.f32 %v790, 0.0
      %v919 = vmax.f32 %v791, 0.0
      %v920 = vmax.f32 %v792, 0.0
      %v921 = vmax.f32 %v793, 0.0
      %v922 = vmax.f32 %v794, 0.0
      %v923 = vmax.f32 %v795, 0.0
      %v924 = vmax.f32 %v796, 0.0
      %v925 = vmax.f32 %v797, 0.0
      %v926 = vmax.f32 %v798, 0.0
      %v927 = vmax.f32 %v799, 0.0
      %v928 = vmax.f32 %v800, 0.0
      %v929 = vmax.f32 %v801, 0.0
      %v930 = vmax.f32 %v802, 0.0
      %v931 = vmax.f32 %v803, 0.0
      %v932 = vmax.f32 %v804, 0.0
      %v933 = vmax.f32 %v805, 0.0
      %v934 = vmax.f32 %v806, 0.0
      %v935 = vmax.f32 %v807, 0.0
      %v936 = vmax.f32 %v808, 0.0
      %v937 = vmax.f32 %v809, 0.0
      %v938 = vmax.f32 %v810, 0.0
      %v939 = vmax.f32 %v811, 0.0
      %v940 = vmax.f32 %v812, 0.0
      %v941 = vmax.f32 %v813, 0.0
      %v942 = vmax.f32 %v814, 0.0
      %v943 = vmax.f32 %v815, 0.0
      %v944 = vmax.f32 %v816, 0.0
      %v945 = vmax.f32 %v817, 0.0
      %v946 = vmax.f32 %v818, 0.0
      %v947 = vmax.f32 %v819, 0.0
      %v948 = vmax.f32 %v820, 0.0
      %v949 = vmax.f32 %v821, 0.0
      %v950 = vmax.f32 %v822, 0.0
      %v951 = vmax.f32 %v823, 0.0
      %v952 = vmax.f32 %v824, 0.0
      %v953 = vmax.f32 %v825, 0.0
      %v954 = vmax.f32 %v826, 0.0
      %v955 = vmax.f32 %v827, 0.0
      %v956 = vmax.f32 %v828, 0.0
      %v957 = vmax.f32 %v829, 0.0
      %v958 = vmax.f32 %v830, 0.0
      %v959 = vmax.f32 %v831, 0.0
      %v960 = vmax.f32 %v832, 0.0
      %v961 = vmax.f32 %v833, 0.0
      %v962 = vmax.f32 %v834, 0.0
      %v963 = vmax.f32 %v835, 0.0
      %v964 = vmax.f32 %v836, 0.0
      %v965 = vmax.f32 %v837, 0.0
      %v966 = vmax.f32 %v838, 0.0
      %v967 = vmax.f32 %v839, 0.0
      %v968 = vmax.f32 %v840, 0.0
      %v969 = vmax.f32 %v841, 0.0
      %v970 = vmax.f32 %v842, 0.0
      %v971 = vmax.f32 %v843, 0.0
      %v972 = vmax.f32 %v844, 0.0
      %v973 = vmax.f32 %v845, 0.0
      %v974 = vmax.f32 %v846, 0.0
      %v975 = vmax.f32 %v847, 0.0
      %v976 = vmax.f32 %v848, 0.0
      %v977 = vmax.f32 %v849, 0.0
      %v978 = vmax.f32 %v850, 0.0
      %v979 = vmax.f32 %v851, 0.0
      %v980 = vmax.f32 %v852, 0.0
      %v981 = vmax.f32 %v853, 0.0
      %v982 = vmax.f32 %v854, 0.0
      %v983 = vmax.f32 %v855, 0.0
      %v984 = vmax.f32 %v856, 0.0
      %v985 = vmax.f32 %v857, 0.0
      %v986 = vmax.f32 %v858, 0.0
      %v987 = vmax.f32 %v859, 0.0
      %v988 = vmax.f32 %v860, 0.0
      %v989 = vmax.f32 %v861, 0.0
      %v990 = vmax.f32 %v862, 0.0
      %v991 = vmax.f32 %v863, 0.0
      %v992 = vpack.c.bf16 %v872, %v864
      %v993 = vpack.c.bf16 %v873, %v865
      %v994 = vpack.c.bf16 %v874, %v866
      %v995 = vpack.c.bf16 %v875, %v867
      %v996 = vpack.c.bf16 %v876, %v868
      %v997 = vpack.c.bf16 %v877, %v869
      %v998 = vpack.c.bf16 %v878, %v870
      %v999 = vpack.c.bf16 %v879, %v871
      %v1000 = vpack.c.bf16 %v888, %v880
      %v1001 = vpack.c.bf16 %v889, %v881
      %v1002 = vpack.c.bf16 %v890, %v882
      %v1003 = vpack.c.bf16 %v891, %v883
      %v1004 = vpack.c.bf16 %v892, %v884
      %v1005 = vpack.c.bf16 %v893, %v885
      %v1006 = vpack.c.bf16 %v894, %v886
      %v1007 = vpack.c.bf16 %v895, %v887
      %v1008 = vpack.c.bf16 %v904, %v896
      %v1009 = vpack.c.bf16 %v905, %v897
      %v1010 = vpack.c.bf16 %v906, %v898
      %v1011 = vpack.c.bf16 %v907, %v899
      %v1012 = vpack.c.bf16 %v908, %v900
      %v1013 = vpack.c.bf16 %v909, %v901
      %v1014 = vpack.c.bf16 %v910, %v902
      %v1015 = vpack.c.bf16 %v911, %v903
      %v1016 = vpack.c.bf16 %v920, %v912
      %v1017 = vpack.c.bf16 %v921, %v913
      %v1018 = vpack.c.bf16 %v922, %v914
      %v1019 = vpack.c.bf16 %v923, %v915
      %v1020 = vpack.c.bf16 %v924, %v916
      %v1021 = vpack.c.bf16 %v925, %v917
      %v1022 = vpack.c.bf16 %v926, %v918
      %v1023 = vpack.c.bf16 %v927, %v919
      %v1024 = vpack.c.bf16 %v936, %v928
      %v1025 = vpack.c.bf16 %v937, %v929
      %v1026 = vpack.c.bf16 %v938, %v930
      %v1027 = vpack.c.bf16 %v939, %v931
      %v1028 = vpack.c.bf16 %v940, %v932
      %v1029 = vpack.c.bf16 %v941, %v933
      %v1030 = vpack.c.bf16 %v942, %v934
      %v1031 = vpack.c.bf16 %v943, %v935
      %v1032 = vpack.c.bf16 %v952, %v944
      %v1033 = vpack.c.bf16 %v953, %v945
      %v1034 = vpack.c.bf16 %v954, %v946
      %v1035 = vpack.c.bf16 %v955, %v947
      %v1036 = vpack.c.bf16 %v956, %v948
      %v1037 = vpack.c.bf16 %v957, %v949
      %v1038 = vpack.c.bf16 %v958, %v950
      %v1039 = vpack.c.bf16 %v959, %v951
      %v1040 = vpack.c.bf16 %v968, %v960
      %v1041 = vpack.c.bf16 %v969, %v961
      %v1042 = vpack.c.bf16 %v970, %v962
      %v1043 = vpack.c.bf16 %v971, %v963
      %v1044 = vpack.c.bf16 %v972, %v964
      %v1045 = vpack.c.bf16 %v973, %v965
      %v1046 = vpack.c.bf16 %v974, %v966
      %v1047 = vpack.c.bf16 %v975, %v967
      %v1048 = vpack.c.bf16 %v984, %v976
      %v1049 = vpack.c.bf16 %v985, %v977
      %v1050 = vpack.c.bf16 %v986, %v978
      %v1051 = vpack.c.bf16 %v987, %v979
      %v1052 = vpack.c.bf16 %v988, %v980
      %v1053 = vpack.c.bf16 %v989, %v981
      %v1054 = vpack.c.bf16 %v990, %v982
      %v1055 = vpack.c.bf16 %v991, %v983
      %v1056 = vld [vmem:[%s466] sm:$0xf]
      %v1057 = vld [vmem:[%s466 + $0x4] sm:$0xf]
      %v1058 = vld [vmem:[%s466 + $0x8] sm:$0xf]
      %v1059 = vld [vmem:[%s466 + $0xc] sm:$0xf]
      %v1060 = vld [vmem:[%s466 + $0x10] sm:$0xf]
      %v1061 = vld [vmem:[%s466 + $0x14] sm:$0xf]
      %v1062 = vld [vmem:[%s466 + $0x18] sm:$0xf]
      %v1063 = vld [vmem:[%s466 + $0x1c] sm:$0xf]
      %v1064 = vld [vmem:[%s466 + $0x20] sm:$0xf]
      %v1065 = vld [vmem:[%s466 + $0x24] sm:$0xf]
      %v1066 = vld [vmem:[%s466 + $0x28] sm:$0xf]
      %v1067 = vld [vmem:[%s466 + $0x2c] sm:$0xf]
      %v1068 = vld [vmem:[%s466 + $0x30] sm:$0xf]
      %v1069 = vld [vmem:[%s466 + $0x34] sm:$0xf]
      %v1070 = vld [vmem:[%s466 + $0x38] sm:$0xf]
      %v1071 = vld [vmem:[%s466 + $0x3c] sm:$0xf]
      %v1072 = vld [vmem:[%s466 + $0x40] sm:$0xf]
      %v1073 = vld [vmem:[%s466 + $0x44] sm:$0xf]
      %v1074 = vld [vmem:[%s466 + $0x48] sm:$0xf]
      %v1075 = vld [vmem:[%s466 + $0x4c] sm:$0xf]
      %v1076 = vld [vmem:[%s466 + $0x50] sm:$0xf]
      %v1077 = vld [vmem:[%s466 + $0x54] sm:$0xf]
      %v1078 = vld [vmem:[%s466 + $0x58] sm:$0xf]
      %v1079 = vld [vmem:[%s466 + $0x5c] sm:$0xf]
      %v1080 = vld [vmem:[%s466 + $0x60] sm:$0xf]
      %v1081 = vld [vmem:[%s466 + $0x64] sm:$0xf]
      %v1082 = vld [vmem:[%s466 + $0x68] sm:$0xf]
      %v1083 = vld [vmem:[%s466 + $0x6c] sm:$0xf]
      %v1084 = vld [vmem:[%s466 + $0x70] sm:$0xf]
      %v1085 = vld [vmem:[%s466 + $0x74] sm:$0xf]
      %v1086 = vld [vmem:[%s466 + $0x78] sm:$0xf]
      %v1087 = vld [vmem:[%s466 + $0x7c] sm:$0xf]
      %v1088 = vld [vmem:[%s466 + $0x80] sm:$0xf]
      %v1089 = vld [vmem:[%s466 + $0x84] sm:$0xf]
      %v1090 = vld [vmem:[%s466 + $0x88] sm:$0xf]
      %v1091 = vld [vmem:[%s466 + $0x8c] sm:$0xf]
      %v1092 = vld [vmem:[%s466 + $0x90] sm:$0xf]
      %v1093 = vld [vmem:[%s466 + $0x94] sm:$0xf]
      %v1094 = vld [vmem:[%s466 + $0x98] sm:$0xf]
      %v1095 = vld [vmem:[%s466 + $0x9c] sm:$0xf]
      %v1096 = vld [vmem:[%s466 + $0xa0] sm:$0xf]
      %v1097 = vld [vmem:[%s466 + $0xa4] sm:$0xf]
      %v1098 = vld [vmem:[%s466 + $0xa8] sm:$0xf]
      %v1099 = vld [vmem:[%s466 + $0xac] sm:$0xf]
      %v1100 = vld [vmem:[%s466 + $0xb0] sm:$0xf]
      %v1101 = vld [vmem:[%s466 + $0xb4] sm:$0xf]
      %v1102 = vld [vmem:[%s466 + $0xb8] sm:$0xf]
      %v1103 = vld [vmem:[%s466 + $0xbc] sm:$0xf]
      %v1104 = vld [vmem:[%s466 + $0xc0] sm:$0xf]
      %v1105 = vld [vmem:[%s466 + $0xc4] sm:$0xf]
      %v1106 = vld [vmem:[%s466 + $0xc8] sm:$0xf]
      %v1107 = vld [vmem:[%s466 + $0xcc] sm:$0xf]
      %v1108 = vld [vmem:[%s466 + $0xd0] sm:$0xf]
      %v1109 = vld [vmem:[%s466 + $0xd4] sm:$0xf]
      %v1110 = vld [vmem:[%s466 + $0xd8] sm:$0xf]
      %v1111 = vld [vmem:[%s466 + $0xdc] sm:$0xf]
      %v1112 = vld [vmem:[%s466 + $0xe0] sm:$0xf]
      %v1113 = vld [vmem:[%s466 + $0xe4] sm:$0xf]
      %v1114 = vld [vmem:[%s466 + $0xe8] sm:$0xf]
      %v1115 = vld [vmem:[%s466 + $0xec] sm:$0xf]
      %v1116 = vld [vmem:[%s466 + $0xf0] sm:$0xf]
      %v1117 = vld [vmem:[%s466 + $0xf4] sm:$0xf]
      %v1118 = vld [vmem:[%s466 + $0xf8] sm:$0xf]
      %v1119 = vld [vmem:[%s466 + $0xfc] sm:$0xf]
      %v1120 = vld [vmem:[%s466 + $0x100] sm:$0xf]
      %v1121 = vld [vmem:[%s466 + $0x104] sm:$0xf]
      %v1122 = vld [vmem:[%s466 + $0x108] sm:$0xf]
      %v1123 = vld [vmem:[%s466 + $0x10c] sm:$0xf]
      %v1124 = vld [vmem:[%s466 + $0x110] sm:$0xf]
      %v1125 = vld [vmem:[%s466 + $0x114] sm:$0xf]
      %v1126 = vld [vmem:[%s466 + $0x118] sm:$0xf]
      %v1127 = vld [vmem:[%s466 + $0x11c] sm:$0xf]
      %v1128 = vld [vmem:[%s466 + $0x120] sm:$0xf]
      %v1129 = vld [vmem:[%s466 + $0x124] sm:$0xf]
      %v1130 = vld [vmem:[%s466 + $0x128] sm:$0xf]
      %v1131 = vld [vmem:[%s466 + $0x12c] sm:$0xf]
      %v1132 = vld [vmem:[%s466 + $0x130] sm:$0xf]
      %v1133 = vld [vmem:[%s466 + $0x134] sm:$0xf]
      %v1134 = vld [vmem:[%s466 + $0x138] sm:$0xf]
      %v1135 = vld [vmem:[%s466 + $0x13c] sm:$0xf]
      %v1136 = vld [vmem:[%s466 + $0x140] sm:$0xf]
      %v1137 = vld [vmem:[%s466 + $0x144] sm:$0xf]
      %v1138 = vld [vmem:[%s466 + $0x148] sm:$0xf]
      %v1139 = vld [vmem:[%s466 + $0x14c] sm:$0xf]
      %v1140 = vld [vmem:[%s466 + $0x150] sm:$0xf]
      %v1141 = vld [vmem:[%s466 + $0x154] sm:$0xf]
      %v1142 = vld [vmem:[%s466 + $0x158] sm:$0xf]
      %v1143 = vld [vmem:[%s466 + $0x15c] sm:$0xf]
      %v1144 = vld [vmem:[%s466 + $0x160] sm:$0xf]
      %v1145 = vld [vmem:[%s466 + $0x164] sm:$0xf]
      %v1146 = vld [vmem:[%s466 + $0x168] sm:$0xf]
      %v1147 = vld [vmem:[%s466 + $0x16c] sm:$0xf]
      %v1148 = vld [vmem:[%s466 + $0x170] sm:$0xf]
      %v1149 = vld [vmem:[%s466 + $0x174] sm:$0xf]
      %v1150 = vld [vmem:[%s466 + $0x178] sm:$0xf]
      %v1151 = vld [vmem:[%s466 + $0x17c] sm:$0xf]
      %v1152 = vld [vmem:[%s466 + $0x180] sm:$0xf]
      %v1153 = vld [vmem:[%s466 + $0x184] sm:$0xf]
      %v1154 = vld [vmem:[%s466 + $0x188] sm:$0xf]
      %v1155 = vld [vmem:[%s466 + $0x18c] sm:$0xf]
      %v1156 = vld [vmem:[%s466 + $0x190] sm:$0xf]
      %v1157 = vld [vmem:[%s466 + $0x194] sm:$0xf]
      %v1158 = vld [vmem:[%s466 + $0x198] sm:$0xf]
      %v1159 = vld [vmem:[%s466 + $0x19c] sm:$0xf]
      %v1160 = vld [vmem:[%s466 + $0x1a0] sm:$0xf]
      %v1161 = vld [vmem:[%s466 + $0x1a4] sm:$0xf]
      %v1162 = vld [vmem:[%s466 + $0x1a8] sm:$0xf]
      %v1163 = vld [vmem:[%s466 + $0x1ac] sm:$0xf]
      %v1164 = vld [vmem:[%s466 + $0x1b0] sm:$0xf]
      %v1165 = vld [vmem:[%s466 + $0x1b4] sm:$0xf]
      %v1166 = vld [vmem:[%s466 + $0x1b8] sm:$0xf]
      %v1167 = vld [vmem:[%s466 + $0x1bc] sm:$0xf]
      %v1168 = vld [vmem:[%s466 + $0x1c0] sm:$0xf]
      %v1169 = vld [vmem:[%s466 + $0x1c4] sm:$0xf]
      %v1170 = vld [vmem:[%s466 + $0x1c8] sm:$0xf]
      %v1171 = vld [vmem:[%s466 + $0x1cc] sm:$0xf]
      %v1172 = vld [vmem:[%s466 + $0x1d0] sm:$0xf]
      %v1173 = vld [vmem:[%s466 + $0x1d4] sm:$0xf]
      %v1174 = vld [vmem:[%s466 + $0x1d8] sm:$0xf]
      %v1175 = vld [vmem:[%s466 + $0x1dc] sm:$0xf]
      %v1176 = vld [vmem:[%s466 + $0x1e0] sm:$0xf]
      %v1177 = vld [vmem:[%s466 + $0x1e4] sm:$0xf]
      %v1178 = vld [vmem:[%s466 + $0x1e8] sm:$0xf]
      %v1179 = vld [vmem:[%s466 + $0x1ec] sm:$0xf]
      %v1180 = vld [vmem:[%s466 + $0x1f0] sm:$0xf]
      %v1181 = vld [vmem:[%s466 + $0x1f4] sm:$0xf]
      %v1182 = vld [vmem:[%s466 + $0x1f8] sm:$0xf]
      %v1183 = vld [vmem:[%s466 + $0x1fc] sm:$0xf]
      %v1184 = vld [vmem:[%s469] sm:$0x1]
      %v1186 = vlaneseq
      %v1187 = vshrl.u32 %v1186, 7
      %v1188 = vsub.s32 0, %v1187
      %v1189 = vrot.slane %v1184, %v1188
      %v1319 = vunpack.c.l.b16 %v1056
      %v1320 = vunpack.c.l.b16 %v1057
      %v1321 = vunpack.c.l.b16 %v1058
      %v1322 = vunpack.c.l.b16 %v1059
      %v1323 = vunpack.c.l.b16 %v1060
      %v1324 = vunpack.c.l.b16 %v1061
      %v1325 = vunpack.c.l.b16 %v1062
      %v1326 = vunpack.c.l.b16 %v1063
      %v1327 = vunpack.c.l.b16 %v1064
      %v1328 = vunpack.c.l.b16 %v1065
      %v1329 = vunpack.c.l.b16 %v1066
      %v1330 = vunpack.c.l.b16 %v1067
      %v1331 = vunpack.c.l.b16 %v1068
      %v1332 = vunpack.c.l.b16 %v1069
      %v1333 = vunpack.c.l.b16 %v1070
      %v1334 = vunpack.c.l.b16 %v1071
      %v1335 = vunpack.c.l.b16 %v1072
      %v1336 = vunpack.c.l.b16 %v1073
      %v1337 = vunpack.c.l.b16 %v1074
      %v1338 = vunpack.c.l.b16 %v1075
      %v1339 = vunpack.c.l.b16 %v1076
      %v1340 = vunpack.c.l.b16 %v1077
      %v1341 = vunpack.c.l.b16 %v1078
      %v1342 = vunpack.c.l.b16 %v1079
      %v1343 = vunpack.c.l.b16 %v1080
      %v1344 = vunpack.c.l.b16 %v1081
      %v1345 = vunpack.c.l.b16 %v1082
      %v1346 = vunpack.c.l.b16 %v1083
      %v1347 = vunpack.c.l.b16 %v1084
      %v1348 = vunpack.c.l.b16 %v1085
      %v1349 = vunpack.c.l.b16 %v1086
      %v1350 = vunpack.c.l.b16 %v1087
      %v1351 = vunpack.c.l.b16 %v1088
      %v1352 = vunpack.c.l.b16 %v1089
      %v1353 = vunpack.c.l.b16 %v1090
      %v1354 = vunpack.c.l.b16 %v1091
      %v1355 = vunpack.c.l.b16 %v1092
      %v1356 = vunpack.c.l.b16 %v1093
      %v1357 = vunpack.c.l.b16 %v1094
      %v1358 = vunpack.c.l.b16 %v1095
      %v1359 = vunpack.c.l.b16 %v1096
      %v1360 = vunpack.c.l.b16 %v1097
      %v1361 = vunpack.c.l.b16 %v1098
      %v1362 = vunpack.c.l.b16 %v1099
      %v1363 = vunpack.c.l.b16 %v1100
      %v1364 = vunpack.c.l.b16 %v1101
      %v1365 = vunpack.c.l.b16 %v1102
      %v1366 = vunpack.c.l.b16 %v1103
      %v1367 = vunpack.c.l.b16 %v1104
      %v1368 = vunpack.c.l.b16 %v1105
      %v1369 = vunpack.c.l.b16 %v1106
      %v1370 = vunpack.c.l.b16 %v1107
      %v1371 = vunpack.c.l.b16 %v1108
      %v1372 = vunpack.c.l.b16 %v1109
      %v1373 = vunpack.c.l.b16 %v1110
      %v1374 = vunpack.c.l.b16 %v1111
      %v1375 = vunpack.c.l.b16 %v1112
      %v1376 = vunpack.c.l.b16 %v1113
      %v1377 = vunpack.c.l.b16 %v1114
      %v1378 = vunpack.c.l.b16 %v1115
      %v1379 = vunpack.c.l.b16 %v1116
      %v1380 = vunpack.c.l.b16 %v1117
      %v1381 = vunpack.c.l.b16 %v1118
      %v1382 = vunpack.c.l.b16 %v1119
      %v1383 = vunpack.c.l.b16 %v1120
      %v1384 = vunpack.c.l.b16 %v1121
      %v1385 = vunpack.c.l.b16 %v1122
      %v1386 = vunpack.c.l.b16 %v1123
      %v1387 = vunpack.c.l.b16 %v1124
      %v1388 = vunpack.c.l.b16 %v1125
      %v1389 = vunpack.c.l.b16 %v1126
      %v1390 = vunpack.c.l.b16 %v1127
      %v1391 = vunpack.c.l.b16 %v1128
      %v1392 = vunpack.c.l.b16 %v1129
      %v1393 = vunpack.c.l.b16 %v1130
      %v1394 = vunpack.c.l.b16 %v1131
      %v1395 = vunpack.c.l.b16 %v1132
      %v1396 = vunpack.c.l.b16 %v1133
      %v1397 = vunpack.c.l.b16 %v1134
      %v1398 = vunpack.c.l.b16 %v1135
      %v1399 = vunpack.c.l.b16 %v1136
      %v1400 = vunpack.c.l.b16 %v1137
      %v1401 = vunpack.c.l.b16 %v1138
      %v1402 = vunpack.c.l.b16 %v1139
      %v1403 = vunpack.c.l.b16 %v1140
      %v1404 = vunpack.c.l.b16 %v1141
      %v1405 = vunpack.c.l.b16 %v1142
      %v1406 = vunpack.c.l.b16 %v1143
      %v1407 = vunpack.c.l.b16 %v1144
      %v1408 = vunpack.c.l.b16 %v1145
      %v1409 = vunpack.c.l.b16 %v1146
      %v1410 = vunpack.c.l.b16 %v1147
      %v1411 = vunpack.c.l.b16 %v1148
      %v1412 = vunpack.c.l.b16 %v1149
      %v1413 = vunpack.c.l.b16 %v1150
      %v1414 = vunpack.c.l.b16 %v1151
      %v1415 = vunpack.c.l.b16 %v1152
      %v1416 = vunpack.c.l.b16 %v1153
      %v1417 = vunpack.c.l.b16 %v1154
      %v1418 = vunpack.c.l.b16 %v1155
      %v1419 = vunpack.c.l.b16 %v1156
      %v1420 = vunpack.c.l.b16 %v1157
      %v1421 = vunpack.c.l.b16 %v1158
      %v1422 = vunpack.c.l.b16 %v1159
      %v1423 = vunpack.c.l.b16 %v1160
      %v1424 = vunpack.c.l.b16 %v1161
      %v1425 = vunpack.c.l.b16 %v1162
      %v1426 = vunpack.c.l.b16 %v1163
      %v1427 = vunpack.c.l.b16 %v1164
      %v1428 = vunpack.c.l.b16 %v1165
      %v1429 = vunpack.c.l.b16 %v1166
      %v1430 = vunpack.c.l.b16 %v1167
      %v1431 = vunpack.c.l.b16 %v1168
      %v1432 = vunpack.c.l.b16 %v1169
      %v1433 = vunpack.c.l.b16 %v1170
      %v1434 = vunpack.c.l.b16 %v1171
      %v1435 = vunpack.c.l.b16 %v1172
      %v1436 = vunpack.c.l.b16 %v1173
      %v1437 = vunpack.c.l.b16 %v1174
      %v1438 = vunpack.c.l.b16 %v1175
      %v1439 = vunpack.c.l.b16 %v1176
      %v1440 = vunpack.c.l.b16 %v1177
      %v1441 = vunpack.c.l.b16 %v1178
      %v1442 = vunpack.c.l.b16 %v1179
      %v1443 = vunpack.c.l.b16 %v1180
      %v1444 = vunpack.c.l.b16 %v1181
      %v1445 = vunpack.c.l.b16 %v1182
      %v1446 = vunpack.c.l.b16 %v1183
      %v1447 = vpack.c.b16 %v1320, %v1319
      %v1448 = vpack.c.b16 %v1322, %v1321
      %v1449 = vpack.c.b16 %v1324, %v1323
      %v1450 = vpack.c.b16 %v1326, %v1325
      %v1451 = vpack.c.b16 %v1328, %v1327
      %v1452 = vpack.c.b16 %v1330, %v1329
      %v1453 = vpack.c.b16 %v1332, %v1331
      %v1454 = vpack.c.b16 %v1334, %v1333
      %v1455 = vpack.c.b16 %v1336, %v1335
      %v1456 = vpack.c.b16 %v1338, %v1337
      %v1457 = vpack.c.b16 %v1340, %v1339
      %v1458 = vpack.c.b16 %v1342, %v1341
      %v1459 = vpack.c.b16 %v1344, %v1343
      %v1460 = vpack.c.b16 %v1346, %v1345
      %v1461 = vpack.c.b16 %v1348, %v1347
      %v1462 = vpack.c.b16 %v1350, %v1349
      %v1463 = vpack.c.b16 %v1352, %v1351
      %v1464 = vpack.c.b16 %v1354, %v1353
      %v1465 = vpack.c.b16 %v1356, %v1355
      %v1466 = vpack.c.b16 %v1358, %v1357
      %v1467 = vpack.c.b16 %v1360, %v1359
      %v1468 = vpack.c.b16 %v1362, %v1361
      %v1469 = vpack.c.b16 %v1364, %v1363
      %v1470 = vpack.c.b16 %v1366, %v1365
      %v1471 = vpack.c.b16 %v1368, %v1367
      %v1472 = vpack.c.b16 %v1370, %v1369
      %v1473 = vpack.c.b16 %v1372, %v1371
      %v1474 = vpack.c.b16 %v1374, %v1373
      %v1475 = vpack.c.b16 %v1376, %v1375
      %v1476 = vpack.c.b16 %v1378, %v1377
      %v1477 = vpack.c.b16 %v1380, %v1379
      %v1478 = vpack.c.b16 %v1382, %v1381
      %v1479 = vpack.c.b16 %v1384, %v1383
      %v1480 = vpack.c.b16 %v1386, %v1385
      %v1481 = vpack.c.b16 %v1388, %v1387
      %v1482 = vpack.c.b16 %v1390, %v1389
      %v1483 = vpack.c.b16 %v1392, %v1391
      %v1484 = vpack.c.b16 %v1394, %v1393
      %v1485 = vpack.c.b16 %v1396, %v1395
      %v1486 = vpack.c.b16 %v1398, %v1397
      %v1487 = vpack.c.b16 %v1400, %v1399
      %v1488 = vpack.c.b16 %v1402, %v1401
      %v1489 = vpack.c.b16 %v1404, %v1403
      %v1490 = vpack.c.b16 %v1406, %v1405
      %v1491 = vpack.c.b16 %v1408, %v1407
      %v1492 = vpack.c.b16 %v1410, %v1409
      %v1493 = vpack.c.b16 %v1412, %v1411
      %v1494 = vpack.c.b16 %v1414, %v1413
      %v1495 = vpack.c.b16 %v1416, %v1415
      %v1496 = vpack.c.b16 %v1418, %v1417
      %v1497 = vpack.c.b16 %v1420, %v1419
      %v1498 = vpack.c.b16 %v1422, %v1421
      %v1499 = vpack.c.b16 %v1424, %v1423
      %v1500 = vpack.c.b16 %v1426, %v1425
      %v1501 = vpack.c.b16 %v1428, %v1427
      %v1502 = vpack.c.b16 %v1430, %v1429
      %v1503 = vpack.c.b16 %v1432, %v1431
      %v1504 = vpack.c.b16 %v1434, %v1433
      %v1505 = vpack.c.b16 %v1436, %v1435
      %v1506 = vpack.c.b16 %v1438, %v1437
      %v1507 = vpack.c.b16 %v1440, %v1439
      %v1508 = vpack.c.b16 %v1442, %v1441
      %v1509 = vpack.c.b16 %v1444, %v1443
      %v1510 = vpack.c.b16 %v1446, %v1445
      %1575 = vmatprep.subr.bf16.mxu0 0
      %1576 = vmatpush1.bf16.msra.mxu0 %v1447
      %1577 = vmatprep.subr.bf16.mxu0 0
      %1578 = vmatpush1.bf16.msra.mxu0 %v1448
      %1579 = vmatprep.subr.bf16.mxu0 0
      %1580 = vmatpush1.bf16.msra.mxu0 %v1449
      %1581 = vmatprep.subr.bf16.mxu0 0
      %1582 = vmatpush1.bf16.msra.mxu0 %v1450
      %1583 = vmatprep.subr.bf16.mxu0 0
      %1584 = vmatpush1.bf16.msra.mxu0 %v1451
      %1585 = vmatprep.subr.bf16.mxu0 0
      %1586 = vmatpush1.bf16.msra.mxu0 %v1452
      %1587 = vmatprep.subr.bf16.mxu0 0
      %1588 = vmatpush1.bf16.msra.mxu0 %v1453
      %1589 = vmatprep.subr.bf16.mxu0 0
      %1590 = vmatpush1.bf16.msra.mxu0 %v1454
      %1591 = vmatprep.subr.bf16.mxu0 0
      %1592 = vmatpush1.bf16.msra.mxu0 %v1455
      %1593 = vmatprep.subr.bf16.mxu0 0
      %1594 = vmatpush1.bf16.msra.mxu0 %v1456
      %1595 = vmatprep.subr.bf16.mxu0 0
      %1596 = vmatpush1.bf16.msra.mxu0 %v1457
      %1597 = vmatprep.subr.bf16.mxu0 0
      %1598 = vmatpush1.bf16.msra.mxu0 %v1458
      %1599 = vmatprep.subr.bf16.mxu0 0
      %1600 = vmatpush1.bf16.msra.mxu0 %v1459
      %1601 = vmatprep.subr.bf16.mxu0 0
      %1602 = vmatpush1.bf16.msra.mxu0 %v1460
      %1603 = vmatprep.subr.bf16.mxu0 0
      %1604 = vmatpush1.bf16.msra.mxu0 %v1461
      %1605 = vmatprep.subr.bf16.mxu0 0
      %1606 = vmatpush1.bf16.msra.mxu0 %v1462
      %1607 = vmatprep.mubr.bf16.mxu0 %v993
      %1608 = vmatmul.mubr.bf16.gmra.mrb[0].mxu0 %v992
      %v1609 = vpop.f32.mrb[0].mxu0
      %v1610 = vadd.f32 %v1189, %v1609
      %v1611 = vpop.f32.mrb[0].mxu0
      %v1612 = vpop.f32.mrb[0].mxu0
      %v1613 = vadd.f32 %v1189, %v1612
      %v1614 = vpop.f32.mrb[0].mxu0
      %1615 = vmatprep.mubr.bf16.mxu0 %v1001
      %1616 = vmatmul.mubr.bf16.gmra.mrb[0].mxu0 %v1000
      %v1617 = vpop.f32.mrb[0].mxu0
      %v1618 = vadd.f32 %v1189, %v1617
      %v1619 = vpop.f32.mrb[0].mxu0
      %v1620 = vpop.f32.mrb[0].mxu0
      %v1621 = vadd.f32 %v1189, %v1620
      %v1622 = vpop.f32.mrb[0].mxu0
      %1623 = vmatprep.mubr.bf16.mxu0 %v1009
      %1624 = vmatmul.mubr.bf16.gmra.mrb[0].mxu0 %v1008
      %v1625 = vpop.f32.mrb[0].mxu0
      %v1626 = vadd.f32 %v1189, %v1625
      %v1627 = vpop.f32.mrb[0].mxu0
      %v1628 = vpop.f32.mrb[0].mxu0
      %v1629 = vadd.f32 %v1189, %v1628
      %v1630 = vpop.f32.mrb[0].mxu0
      %1631 = vmatprep.mubr.bf16.mxu0 %v1017
      %1632 = vmatmul.mubr.bf16.gmra.mrb[0].mxu0 %v1016
      %v1633 = vpop.f32.mrb[0].mxu0
      %v1634 = vadd.f32 %v1189, %v1633
      %v1635 = vpop.f32.mrb[0].mxu0
      %v1636 = vpop.f32.mrb[0].mxu0
      %v1637 = vadd.f32 %v1189, %v1636
      %v1638 = vpop.f32.mrb[0].mxu0
      %1639 = vmatprep.mubr.bf16.mxu0 %v1025
      %1640 = vmatmul.mubr.bf16.gmra.mrb[0].mxu0 %v1024
      %v1641 = vpop.f32.mrb[0].mxu0
      %v1642 = vadd.f32 %v1189, %v1641
      %v1643 = vpop.f32.mrb[0].mxu0
      %v1644 = vpop.f32.mrb[0].mxu0
      %v1645 = vadd.f32 %v1189, %v1644
      %v1646 = vpop.f32.mrb[0].mxu0
      %1647 = vmatprep.mubr.bf16.mxu0 %v1033
      %1648 = vmatmul.mubr.bf16.gmra.mrb[0].mxu0 %v1032
      %v1649 = vpop.f32.mrb[0].mxu0
      %v1650 = vadd.f32 %v1189, %v1649
      %v1651 = vpop.f32.mrb[0].mxu0
      %v1652 = vpop.f32.mrb[0].mxu0
      %v1653 = vadd.f32 %v1189, %v1652
      %v1654 = vpop.f32.mrb[0].mxu0
      %1655 = vmatprep.mubr.bf16.mxu0 %v1041
      %1656 = vmatmul.mubr.bf16.gmra.mrb[0].mxu0 %v1040
      %v1657 = vpop.f32.mrb[0].mxu0
      %v1658 = vadd.f32 %v1189, %v1657
      %v1659 = vpop.f32.mrb[0].mxu0
      %v1660 = vpop.f32.mrb[0].mxu0
      %v1661 = vadd.f32 %v1189, %v1660
      %v1662 = vpop.f32.mrb[0].mxu0
      %1663 = vmatprep.mubr.bf16.mxu0 %v1049
      %1664 = vmatmul.mubr.bf16.gmra.mrb[0].mxu0 %v1048
      %v1665 = vpop.f32.mrb[0].mxu0
      %v1666 = vadd.f32 %v1189, %v1665
      %v1667 = vpop.f32.mrb[0].mxu0
      %v1668 = vpop.f32.mrb[0].mxu0
      %v1669 = vadd.f32 %v1189, %v1668
      %v1670 = vpop.f32.mrb[0].mxu0
      %1671 = vdwg.mxu0
      %1672 = vmatprep.subr.bf16.mxu0 0
      %1673 = vmatpush1.bf16.msra.mxu0 %v1463
      %1674 = vmatprep.subr.bf16.mxu0 0
      %1675 = vmatpush1.bf16.msra.mxu0 %v1464
      %1676 = vmatprep.subr.bf16.mxu0 0
      %1677 = vmatpush1.bf16.msra.mxu0 %v1465
      %1678 = vmatprep.subr.bf16.mxu0 0
      %1679 = vmatpush1.bf16.msra.mxu0 %v1466
      %1680 = vmatprep.subr.bf16.mxu0 0
      %1681 = vmatpush1.bf16.msra.mxu0 %v1467
      %1682 = vmatprep.subr.bf16.mxu0 0
      %1683 = vmatpush1.bf16.msra.mxu0 %v1468
      %1684 = vmatprep.subr.bf16.mxu0 0
      %1685 = vmatpush1.bf16.msra.mxu0 %v1469
      %1686 = vmatprep.subr.bf16.mxu0 0
      %1687 = vmatpush1.bf16.msra.mxu0 %v1470
      %1688 = vmatprep.subr.bf16.mxu0 0
      %1689 = vmatpush1.bf16.msra.mxu0 %v1471
      %1690 = vmatprep.subr.bf16.mxu0 0
      %1691 = vmatpush1.bf16.msra.mxu0 %v1472
      %1692 = vmatprep.subr.bf16.mxu0 0
      %1693 = vmatpush1.bf16.msra.mxu0 %v1473
      %1694 = vmatprep.subr.bf16.mxu0 0
      %1695 = vmatpush1.bf16.msra.mxu0 %v1474
      %1696 = vmatprep.subr.bf16.mxu0 0
      %1697 = vmatpush1.bf16.msra.mxu0 %v1475
      %1698 = vmatprep.subr.bf16.mxu0 0
      %1699 = vmatpush1.bf16.msra.mxu0 %v1476
      %1700 = vmatprep.subr.bf16.mxu0 0
      %1701 = vmatpush1.bf16.msra.mxu0 %v1477
      %1702 = vmatprep.subr.bf16.mxu0 0
      %1703 = vmatpush1.bf16.msra.mxu0 %v1478
      %1704 = vmatprep.mubr.bf16.mxu0 %v995
      %1705 = vmatmul.mubr.bf16.gmra.mrb[0].mxu0 %v994
      %v1706 = vpop.f32.mrb[0].mxu0
      %v1707 = vadd.f32 %v1610, %v1706
      %v1708 = vpop.f32.mrb[0].mxu0
      %v1709 = vpop.f32.mrb[0].mxu0
      %v1710 = vadd.f32 %v1613, %v1709
      %v1711 = vpop.f32.mrb[0].mxu0
      %1712 = vmatprep.mubr.bf16.mxu0 %v1003
      %1713 = vmatmul.mubr.bf16.gmra.mrb[0].mxu0 %v1002
      %v1714 = vpop.f32.mrb[0].mxu0
      %v1715 = vadd.f32 %v1618, %v1714
      %v1716 = vpop.f32.mrb[0].mxu0
      %v1717 = vpop.f32.mrb[0].mxu0
      %v1718 = vadd.f32 %v1621, %v1717
      %v1719 = vpop.f32.mrb[0].mxu0
      %1720 = vmatprep.mubr.bf16.mxu0 %v1011
      %1721 = vmatmul.mubr.bf16.gmra.mrb[0].mxu0 %v1010
      %v1722 = vpop.f32.mrb[0].mxu0
      %v1723 = vadd.f32 %v1626, %v1722
      %v1724 = vpop.f32.mrb[0].mxu0
      %v1725 = vpop.f32.mrb[0].mxu0
      %v1726 = vadd.f32 %v1629, %v1725
      %v1727 = vpop.f32.mrb[0].mxu0
      %1728 = vmatprep.mubr.bf16.mxu0 %v1019
      %1729 = vmatmul.mubr.bf16.gmra.mrb[0].mxu0 %v1018
      %v1730 = vpop.f32.mrb[0].mxu0
      %v1731 = vadd.f32 %v1634, %v1730
      %v1732 = vpop.f32.mrb[0].mxu0
      %v1733 = vpop.f32.mrb[0].mxu0
      %v1734 = vadd.f32 %v1637, %v1733
      %v1735 = vpop.f32.mrb[0].mxu0
      %1736 = vmatprep.mubr.bf16.mxu0 %v1027
      %1737 = vmatmul.mubr.bf16.gmra.mrb[0].mxu0 %v1026
      %v1738 = vpop.f32.mrb[0].mxu0
      %v1739 = vadd.f32 %v1642, %v1738
      %v1740 = vpop.f32.mrb[0].mxu0
      %v1741 = vpop.f32.mrb[0].mxu0
      %v1742 = vadd.f32 %v1645, %v1741
      %v1743 = vpop.f32.mrb[0].mxu0
      %1744 = vmatprep.mubr.bf16.mxu0 %v1035
      %1745 = vmatmul.mubr.bf16.gmra.mrb[0].mxu0 %v1034
      %v1746 = vpop.f32.mrb[0].mxu0
      %v1747 = vadd.f32 %v1650, %v1746
      %v1748 = vpop.f32.mrb[0].mxu0
      %v1749 = vpop.f32.mrb[0].mxu0
      %v1750 = vadd.f32 %v1653, %v1749
      %v1751 = vpop.f32.mrb[0].mxu0
      %1752 = vmatprep.mubr.bf16.mxu0 %v1043
      %1753 = vmatmul.mubr.bf16.gmra.mrb[0].mxu0 %v1042
      %v1754 = vpop.f32.mrb[0].mxu0
      %v1755 = vadd.f32 %v1658, %v1754
      %v1756 = vpop.f32.mrb[0].mxu0
      %v1757 = vpop.f32.mrb[0].mxu0
      %v1758 = vadd.f32 %v1661, %v1757
      %v1759 = vpop.f32.mrb[0].mxu0
      %1760 = vmatprep.mubr.bf16.mxu0 %v1051
      %1761 = vmatmul.mubr.bf16.gmra.mrb[0].mxu0 %v1050
      %v1762 = vpop.f32.mrb[0].mxu0
      %v1763 = vadd.f32 %v1666, %v1762
      %v1764 = vpop.f32.mrb[0].mxu0
      %v1765 = vpop.f32.mrb[0].mxu0
      %v1766 = vadd.f32 %v1669, %v1765
      %v1767 = vpop.f32.mrb[0].mxu0
      %1768 = vdwg.mxu0
      %1769 = vmatprep.subr.bf16.mxu0 0
      %1770 = vmatpush1.bf16.msra.mxu0 %v1479
      %1771 = vmatprep.subr.bf16.mxu0 0
      %1772 = vmatpush1.bf16.msra.mxu0 %v1480
      %1773 = vmatprep.subr.bf16.mxu0 0
      %1774 = vmatpush1.bf16.msra.mxu0 %v1481
      %1775 = vmatprep.subr.bf16.mxu0 0
      %1776 = vmatpush1.bf16.msra.mxu0 %v1482
      %1777 = vmatprep.subr.bf16.mxu0 0
      %1778 = vmatpush1.bf16.msra.mxu0 %v1483
      %1779 = vmatprep.subr.bf16.mxu0 0
      %1780 = vmatpush1.bf16.msra.mxu0 %v1484
      %1781 = vmatprep.subr.bf16.mxu0 0
      %1782 = vmatpush1.bf16.msra.mxu0 %v1485
      %1783 = vmatprep.subr.bf16.mxu0 0
      %1784 = vmatpush1.bf16.msra.mxu0 %v1486
      %1785 = vmatprep.subr.bf16.mxu0 0
      %1786 = vmatpush1.bf16.msra.mxu0 %v1487
      %1787 = vmatprep.subr.bf16.mxu0 0
      %1788 = vmatpush1.bf16.msra.mxu0 %v1488
      %1789 = vmatprep.subr.bf16.mxu0 0
      %1790 = vmatpush1.bf16.msra.mxu0 %v1489
      %1791 = vmatprep.subr.bf16.mxu0 0
      %1792 = vmatpush1.bf16.msra.mxu0 %v1490
      %1793 = vmatprep.subr.bf16.mxu0 0
      %1794 = vmatpush1.bf16.msra.mxu0 %v1491
      %1795 = vmatprep.subr.bf16.mxu0 0
      %1796 = vmatpush1.bf16.msra.mxu0 %v1492
      %1797 = vmatprep.subr.bf16.mxu0 0
      %1798 = vmatpush1.bf16.msra.mxu0 %v1493
      %1799 = vmatprep.subr.bf16.mxu0 0
      %1800 = vmatpush1.bf16.msra.mxu0 %v1494
      %1801 = vmatprep.mubr.bf16.mxu0 %v997
      %1802 = vmatmul.mubr.bf16.gmra.mrb[0].mxu0 %v996
      %v1803 = vpop.f32.mrb[0].mxu0
      %v1804 = vadd.f32 %v1707, %v1803
      %v1805 = vpop.f32.mrb[0].mxu0
      %v1806 = vpop.f32.mrb[0].mxu0
      %v1807 = vadd.f32 %v1710, %v1806
      %v1808 = vpop.f32.mrb[0].mxu0
      %1809 = vmatprep.mubr.bf16.mxu0 %v1005
      %1810 = vmatmul.mubr.bf16.gmra.mrb[0].mxu0 %v1004
      %v1811 = vpop.f32.mrb[0].mxu0
      %v1812 = vadd.f32 %v1715, %v1811
      %v1813 = vpop.f32.mrb[0].mxu0
      %v1814 = vpop.f32.mrb[0].mxu0
      %v1815 = vadd.f32 %v1718, %v1814
      %v1816 = vpop.f32.mrb[0].mxu0
      %1817 = vmatprep.mubr.bf16.mxu0 %v1013
      %1818 = vmatmul.mubr.bf16.gmra.mrb[0].mxu0 %v1012
      %v1819 = vpop.f32.mrb[0].mxu0
      %v1820 = vadd.f32 %v1723, %v1819
      %v1821 = vpop.f32.mrb[0].mxu0
      %v1822 = vpop.f32.mrb[0].mxu0
      %v1823 = vadd.f32 %v1726, %v1822
      %v1824 = vpop.f32.mrb[0].mxu0
      %1825 = vmatprep.mubr.bf16.mxu0 %v1021
      %1826 = vmatmul.mubr.bf16.gmra.mrb[0].mxu0 %v1020
      %v1827 = vpop.f32.mrb[0].mxu0
      %v1828 = vadd.f32 %v1731, %v1827
      %v1829 = vpop.f32.mrb[0].mxu0
      %v1830 = vpop.f32.mrb[0].mxu0
      %v1831 = vadd.f32 %v1734, %v1830
      %v1832 = vpop.f32.mrb[0].mxu0
      %1833 = vmatprep.mubr.bf16.mxu0 %v1029
      %1834 = vmatmul.mubr.bf16.gmra.mrb[0].mxu0 %v1028
      %v1835 = vpop.f32.mrb[0].mxu0
      %v1836 = vadd.f32 %v1739, %v1835
      %v1837 = vpop.f32.mrb[0].mxu0
      %v1838 = vpop.f32.mrb[0].mxu0
      %v1839 = vadd.f32 %v1742, %v1838
      %v1840 = vpop.f32.mrb[0].mxu0
      %1841 = vmatprep.mubr.bf16.mxu0 %v1037
      %1842 = vmatmul.mubr.bf16.gmra.mrb[0].mxu0 %v1036
      %v1843 = vpop.f32.mrb[0].mxu0
      %v1844 = vadd.f32 %v1747, %v1843
      %v1845 = vpop.f32.mrb[0].mxu0
      %v1846 = vpop.f32.mrb[0].mxu0
      %v1847 = vadd.f32 %v1750, %v1846
      %v1848 = vpop.f32.mrb[0].mxu0
      %1849 = vmatprep.mubr.bf16.mxu0 %v1045
      %1850 = vmatmul.mubr.bf16.gmra.mrb[0].mxu0 %v1044
      %v1851 = vpop.f32.mrb[0].mxu0
      %v1852 = vadd.f32 %v1755, %v1851
      %v1853 = vpop.f32.mrb[0].mxu0
      %v1854 = vpop.f32.mrb[0].mxu0
      %v1855 = vadd.f32 %v1758, %v1854
      %v1856 = vpop.f32.mrb[0].mxu0
      %1857 = vmatprep.mubr.bf16.mxu0 %v1053
      %1858 = vmatmul.mubr.bf16.gmra.mrb[0].mxu0 %v1052
      %v1859 = vpop.f32.mrb[0].mxu0
      %v1860 = vadd.f32 %v1763, %v1859
      %v1861 = vpop.f32.mrb[0].mxu0
      %v1862 = vpop.f32.mrb[0].mxu0
      %v1863 = vadd.f32 %v1766, %v1862
      %v1864 = vpop.f32.mrb[0].mxu0
      %1865 = vdwg.mxu0
      %1866 = vmatprep.subr.bf16.mxu0 0
      %1867 = vmatpush1.bf16.msra.mxu0 %v1495
      %1868 = vmatprep.subr.bf16.mxu0 0
      %1869 = vmatpush1.bf16.msra.mxu0 %v1496
      %1870 = vmatprep.subr.bf16.mxu0 0
      %1871 = vmatpush1.bf16.msra.mxu0 %v1497
      %1872 = vmatprep.subr.bf16.mxu0 0
      %1873 = vmatpush1.bf16.msra.mxu0 %v1498
      %1874 = vmatprep.subr.bf16.mxu0 0
      %1875 = vmatpush1.bf16.msra.mxu0 %v1499
      %1876 = vmatprep.subr.bf16.mxu0 0
      %1877 = vmatpush1.bf16.msra.mxu0 %v1500
      %1878 = vmatprep.subr.bf16.mxu0 0
      %1879 = vmatpush1.bf16.msra.mxu0 %v1501
      %1880 = vmatprep.subr.bf16.mxu0 0
      %1881 = vmatpush1.bf16.msra.mxu0 %v1502
      %1882 = vmatprep.subr.bf16.mxu0 0
      %1883 = vmatpush1.bf16.msra.mxu0 %v1503
      %1884 = vmatprep.subr.bf16.mxu0 0
      %1885 = vmatpush1.bf16.msra.mxu0 %v1504
      %1886 = vmatprep.subr.bf16.mxu0 0
      %1887 = vmatpush1.bf16.msra.mxu0 %v1505
      %1888 = vmatprep.subr.bf16.mxu0 0
      %1889 = vmatpush1.bf16.msra.mxu0 %v1506
      %1890 = vmatprep.subr.bf16.mxu0 0
      %1891 = vmatpush1.bf16.msra.mxu0 %v1507
      %1892 = vmatprep.subr.bf16.mxu0 0
      %1893 = vmatpush1.bf16.msra.mxu0 %v1508
      %1894 = vmatprep.subr.bf16.mxu0 0
      %1895 = vmatpush1.bf16.msra.mxu0 %v1509
      %1896 = vmatprep.subr.bf16.mxu0 0
      %1897 = vmatpush1.bf16.msra.mxu0 %v1510
      %1898 = vmatprep.mubr.bf16.mxu0 %v999
      %1899 = vmatmul.mubr.bf16.gmra.mrb[0].mxu0 %v998
      %v1900 = vpop.f32.mrb[0].mxu0
      %v1901 = vadd.f32 %v1804, %v1900
      %v1902 = vpop.f32.mrb[0].mxu0
      %v1903 = vpop.f32.mrb[0].mxu0
      %v1904 = vadd.f32 %v1807, %v1903
      %v1905 = vpop.f32.mrb[0].mxu0
      %1906 = vmatprep.mubr.bf16.mxu0 %v1007
      %1907 = vmatmul.mubr.bf16.gmra.mrb[0].mxu0 %v1006
      %v1908 = vpop.f32.mrb[0].mxu0
      %v1909 = vadd.f32 %v1812, %v1908
      %v1910 = vpop.f32.mrb[0].mxu0
      %v1911 = vpop.f32.mrb[0].mxu0
      %v1912 = vadd.f32 %v1815, %v1911
      %v1913 = vpop.f32.mrb[0].mxu0
      %1914 = vmatprep.mubr.bf16.mxu0 %v1015
      %1915 = vmatmul.mubr.bf16.gmra.mrb[0].mxu0 %v1014
      %v1916 = vpop.f32.mrb[0].mxu0
      %v1917 = vadd.f32 %v1820, %v1916
      %v1918 = vpop.f32.mrb[0].mxu0
      %v1919 = vpop.f32.mrb[0].mxu0
      %v1920 = vadd.f32 %v1823, %v1919
      %v1921 = vpop.f32.mrb[0].mxu0
      %1922 = vmatprep.mubr.bf16.mxu0 %v1023
      %1923 = vmatmul.mubr.bf16.gmra.mrb[0].mxu0 %v1022
      %v1924 = vpop.f32.mrb[0].mxu0
      %v1925 = vadd.f32 %v1828, %v1924
      %v1926 = vpop.f32.mrb[0].mxu0
      %v1927 = vpop.f32.mrb[0].mxu0
      %v1928 = vadd.f32 %v1831, %v1927
      %v1929 = vpop.f32.mrb[0].mxu0
      %1930 = vmatprep.mubr.bf16.mxu0 %v1031
      %1931 = vmatmul.mubr.bf16.gmra.mrb[0].mxu0 %v1030
      %v1932 = vpop.f32.mrb[0].mxu0
      %v1933 = vadd.f32 %v1836, %v1932
      %v1934 = vpop.f32.mrb[0].mxu0
      %v1935 = vpop.f32.mrb[0].mxu0
      %v1936 = vadd.f32 %v1839, %v1935
      %v1937 = vpop.f32.mrb[0].mxu0
      %1938 = vmatprep.mubr.bf16.mxu0 %v1039
      %1939 = vmatmul.mubr.bf16.gmra.mrb[0].mxu0 %v1038
      %v1940 = vpop.f32.mrb[0].mxu0
      %v1941 = vadd.f32 %v1844, %v1940
      %v1942 = vpop.f32.mrb[0].mxu0
      %v1943 = vpop.f32.mrb[0].mxu0
      %v1944 = vadd.f32 %v1847, %v1943
      %v1945 = vpop.f32.mrb[0].mxu0
      %1946 = vmatprep.mubr.bf16.mxu0 %v1047
      %1947 = vmatmul.mubr.bf16.gmra.mrb[0].mxu0 %v1046
      %v1948 = vpop.f32.mrb[0].mxu0
      %v1949 = vadd.f32 %v1852, %v1948
      %v1950 = vpop.f32.mrb[0].mxu0
      %v1951 = vpop.f32.mrb[0].mxu0
      %v1952 = vadd.f32 %v1855, %v1951
      %v1953 = vpop.f32.mrb[0].mxu0
      %1954 = vmatprep.mubr.bf16.mxu0 %v1055
      %1955 = vmatmul.mubr.bf16.gmra.mrb[0].mxu0 %v1054
      %v1956 = vpop.f32.mrb[0].mxu0
      %v1957 = vadd.f32 %v1860, %v1956
      %v1958 = vpop.f32.mrb[0].mxu0
      %v1959 = vpop.f32.mrb[0].mxu0
      %v1960 = vadd.f32 %v1863, %v1959
      %v1961 = vpop.f32.mrb[0].mxu0
      %1962 = vdwg.mxu0
      %v1963 = vmax.f32 %v1901, 0.0
      %v1964 = vmax.f32 %v1904, 0.0
      %v1965 = vmax.f32 %v1909, 0.0
      %v1966 = vmax.f32 %v1912, 0.0
      %v1967 = vmax.f32 %v1917, 0.0
      %v1968 = vmax.f32 %v1920, 0.0
      %v1969 = vmax.f32 %v1925, 0.0
      %v1970 = vmax.f32 %v1928, 0.0
      %v1971 = vmax.f32 %v1933, 0.0
      %v1972 = vmax.f32 %v1936, 0.0
      %v1973 = vmax.f32 %v1941, 0.0
      %v1974 = vmax.f32 %v1944, 0.0
      %v1975 = vmax.f32 %v1949, 0.0
      %v1976 = vmax.f32 %v1952, 0.0
      %v1977 = vmax.f32 %v1957, 0.0
      %v1978 = vmax.f32 %v1960, 0.0
      %v1979 = vpack.c.bf16 %v1964, %v1963
      %v1980 = vpack.c.bf16 %v1966, %v1965
      %v1981 = vpack.c.bf16 %v1968, %v1967
      %v1982 = vpack.c.bf16 %v1970, %v1969
      %v1983 = vpack.c.bf16 %v1972, %v1971
      %v1984 = vpack.c.bf16 %v1974, %v1973
      %v1985 = vpack.c.bf16 %v1976, %v1975
      %v1986 = vpack.c.bf16 %v1978, %v1977
      %v1987 = vld [vmem:[%s474] sm:$0xf]
      %v1988 = vld [vmem:[%s474 + $0x4] sm:$0xf]
      %v1989 = vld [vmem:[%s474 + $0x8] sm:$0xf]
      %v1990 = vld [vmem:[%s474 + $0xc] sm:$0xf]
      %v1991 = vld [vmem:[%s474 + $0x10] sm:$0xf]
      %v1992 = vld [vmem:[%s474 + $0x14] sm:$0xf]
      %v1993 = vld [vmem:[%s474 + $0x18] sm:$0xf]
      %v1994 = vld [vmem:[%s474 + $0x1c] sm:$0xf]
      %v1995 = vld [vmem:[%s474 + $0x20] sm:$0xf]
      %v1996 = vld [vmem:[%s474 + $0x24] sm:$0xf]
      %v1997 = vld [vmem:[%s474 + $0x28] sm:$0xf]
      %v1998 = vld [vmem:[%s474 + $0x2c] sm:$0xf]
      %v1999 = vld [vmem:[%s474 + $0x30] sm:$0xf]
      %v2000 = vld [vmem:[%s474 + $0x34] sm:$0xf]
      %v2001 = vld [vmem:[%s474 + $0x38] sm:$0xf]
      %v2002 = vld [vmem:[%s474 + $0x3c] sm:$0xf]
      %v2003 = vld [vmem:[%s478] sm:$0x1]
      %v2005 = vlaneseq
      %v2006 = vshrl.u32 %v2005, 7
      %v2007 = vsub.s32 0, %v2006
      %v2008 = vrot.slane %v2003, %v2007
      %v2026 = vunpack.c.l.b16 %v1987
      %v2027 = vunpack.c.l.b16 %v1988
      %v2028 = vunpack.c.l.b16 %v1989
      %v2029 = vunpack.c.l.b16 %v1990
      %v2030 = vunpack.c.l.b16 %v1991
      %v2031 = vunpack.c.l.b16 %v1992
      %v2032 = vunpack.c.l.b16 %v1993
      %v2033 = vunpack.c.l.b16 %v1994
      %v2034 = vunpack.c.l.b16 %v1995
      %v2035 = vunpack.c.l.b16 %v1996
      %v2036 = vunpack.c.l.b16 %v1997
      %v2037 = vunpack.c.l.b16 %v1998
      %v2038 = vunpack.c.l.b16 %v1999
      %v2039 = vunpack.c.l.b16 %v2000
      %v2040 = vunpack.c.l.b16 %v2001
      %v2041 = vunpack.c.l.b16 %v2002
      %v2042 = vpack.c.b16 %v2027, %v2026
      %v2043 = vpack.c.b16 %v2029, %v2028
      %v2044 = vpack.c.b16 %v2031, %v2030
      %v2045 = vpack.c.b16 %v2033, %v2032
      %v2046 = vpack.c.b16 %v2035, %v2034
      %v2047 = vpack.c.b16 %v2037, %v2036
      %v2048 = vpack.c.b16 %v2039, %v2038
      %v2049 = vpack.c.b16 %v2041, %v2040
      %2058 = vmatprep.subr.bf16.mxu0 0
      %2059 = vmatpush1.bf16.msra.mxu0 %v2042
      %2060 = vmatprep.subr.bf16.mxu0 0
      %2061 = vmatpush1.bf16.msra.mxu0 %v2043
      %2062 = vmatprep.subr.bf16.mxu0 0
      %2063 = vmatpush1.bf16.msra.mxu0 %v2044
      %2064 = vmatprep.subr.bf16.mxu0 0
      %2065 = vmatpush1.bf16.msra.mxu0 %v2045
      %2066 = vmatprep.subr.bf16.mxu0 0
      %2067 = vmatpush1.bf16.msra.mxu0 %v2046
      %2068 = vmatprep.subr.bf16.mxu0 0
      %2069 = vmatpush1.bf16.msra.mxu0 %v2047
      %2070 = vmatprep.subr.bf16.mxu0 0
      %2071 = vmatpush1.bf16.msra.mxu0 %v2048
      %2072 = vmatprep.subr.bf16.mxu0 0
      %2073 = vmatpush1.bf16.msra.mxu0 %v2049
      %2074 = vmatprep.subr.bf16.mxu0 0
      %2075 = vmatpush1.bf16.msra.mxu0 0
      %2076 = vmatprep.subr.bf16.mxu0 0
      %2077 = vmatpush1.bf16.msra.mxu0 0
      %2078 = vmatprep.subr.bf16.mxu0 0
      %2079 = vmatpush1.bf16.msra.mxu0 0
      %2080 = vmatprep.subr.bf16.mxu0 0
      %2081 = vmatpush1.bf16.msra.mxu0 0
      %2082 = vmatprep.subr.bf16.mxu0 0
      %2083 = vmatpush1.bf16.msra.mxu0 0
      %2084 = vmatprep.subr.bf16.mxu0 0
      %2085 = vmatpush1.bf16.msra.mxu0 0
      %2086 = vmatprep.subr.bf16.mxu0 0
      %2087 = vmatpush1.bf16.msra.mxu0 0
      %2088 = vmatprep.subr.bf16.mxu0 0
      %2089 = vmatpush1.bf16.msra.mxu0 0
      %2090 = vmatprep.mubr.bf16.mxu0 0
      %2091 = vmatmul.mubr.bf16.gmra.mrb[0].mxu0 %v1979
      %v2092 = vpop.f32.mrb[0].mxu0
      %v2093 = vadd.f32 %v2008, %v2092
      %v2094 = vpop.f32.mrb[0].mxu0
      %v2095 = vpop.f32.mrb[0].mxu0
      %v2096 = vadd.f32 %v2008, %v2095
      %v2097 = vpop.f32.mrb[0].mxu0
      %2098 = vmatprep.mubr.bf16.mxu0 0
      %2099 = vmatmul.mubr.bf16.gmra.mrb[0].mxu0 %v1980
      %v2100 = vpop.f32.mrb[0].mxu0
      %v2101 = vadd.f32 %v2008, %v2100
      %v2102 = vpop.f32.mrb[0].mxu0
      %v2103 = vpop.f32.mrb[0].mxu0
      %v2104 = vadd.f32 %v2008, %v2103
      %v2105 = vpop.f32.mrb[0].mxu0
      %2106 = vmatprep.mubr.bf16.mxu0 0
      %2107 = vmatmul.mubr.bf16.gmra.mrb[0].mxu0 %v1981
      %v2108 = vpop.f32.mrb[0].mxu0
      %v2109 = vadd.f32 %v2008, %v2108
      %v2110 = vpop.f32.mrb[0].mxu0
      %v2111 = vpop.f32.mrb[0].mxu0
      %v2112 = vadd.f32 %v2008, %v2111
      %v2113 = vpop.f32.mrb[0].mxu0
      %2114 = vmatprep.mubr.bf16.mxu0 0
      %2115 = vmatmul.mubr.bf16.gmra.mrb[0].mxu0 %v1982
      %v2116 = vpop.f32.mrb[0].mxu0
      %v2117 = vadd.f32 %v2008, %v2116
      %v2118 = vpop.f32.mrb[0].mxu0
      %v2119 = vpop.f32.mrb[0].mxu0
      %v2120 = vadd.f32 %v2008, %v2119
      %v2121 = vpop.f32.mrb[0].mxu0
      %2122 = vmatprep.mubr.bf16.mxu0 0
      %2123 = vmatmul.mubr.bf16.gmra.mrb[0].mxu0 %v1983
      %v2124 = vpop.f32.mrb[0].mxu0
      %v2125 = vadd.f32 %v2008, %v2124
      %v2126 = vpop.f32.mrb[0].mxu0
      %v2127 = vpop.f32.mrb[0].mxu0
      %v2128 = vadd.f32 %v2008, %v2127
      %v2129 = vpop.f32.mrb[0].mxu0
      %2130 = vmatprep.mubr.bf16.mxu0 0
      %2131 = vmatmul.mubr.bf16.gmra.mrb[0].mxu0 %v1984
      %v2132 = vpop.f32.mrb[0].mxu0
      %v2133 = vadd.f32 %v2008, %v2132
      %v2134 = vpop.f32.mrb[0].mxu0
      %v2135 = vpop.f32.mrb[0].mxu0
      %v2136 = vadd.f32 %v2008, %v2135
      %v2137 = vpop.f32.mrb[0].mxu0
      %2138 = vmatprep.mubr.bf16.mxu0 0
      %2139 = vmatmul.mubr.bf16.gmra.mrb[0].mxu0 %v1985
      %v2140 = vpop.f32.mrb[0].mxu0
      %v2141 = vadd.f32 %v2008, %v2140
      %v2142 = vpop.f32.mrb[0].mxu0
      %v2143 = vpop.f32.mrb[0].mxu0
      %v2144 = vadd.f32 %v2008, %v2143
      %v2145 = vpop.f32.mrb[0].mxu0
      %2146 = vmatprep.mubr.bf16.mxu0 0
      %2147 = vmatmul.mubr.bf16.gmra.mrb[0].mxu0 %v1986
      %v2148 = vpop.f32.mrb[0].mxu0
      %v2149 = vadd.f32 %v2008, %v2148
      %v2150 = vpop.f32.mrb[0].mxu0
      %v2151 = vpop.f32.mrb[0].mxu0
      %v2152 = vadd.f32 %v2008, %v2151
      %v2153 = vpop.f32.mrb[0].mxu0
      %2154 = vdwg.mxu0
      %v2155 = vmax.f32 %v2093, 0.0
      %v2156 = vmax.f32 %v2096, 0.0
      %v2157 = vmax.f32 %v2101, 0.0
      %v2158 = vmax.f32 %v2104, 0.0
      %v2159 = vmax.f32 %v2109, 0.0
      %v2160 = vmax.f32 %v2112, 0.0
      %v2161 = vmax.f32 %v2117, 0.0
      %v2162 = vmax.f32 %v2120, 0.0
      %v2163 = vmax.f32 %v2125, 0.0
      %v2164 = vmax.f32 %v2128, 0.0
      %v2165 = vmax.f32 %v2133, 0.0
      %v2166 = vmax.f32 %v2136, 0.0
      %v2167 = vmax.f32 %v2141, 0.0
      %v2168 = vmax.f32 %v2144, 0.0
      %v2169 = vmax.f32 %v2149, 0.0
      %v2170 = vmax.f32 %v2152, 0.0
      %v2171 = vpack.c.bf16 %v2156, %v2155
      %v2172 = vpack.c.bf16 %v2158, %v2157
      %v2173 = vpack.c.bf16 %v2160, %v2159
      %v2174 = vpack.c.bf16 %v2162, %v2161
      %v2175 = vpack.c.bf16 %v2164, %v2163
      %v2176 = vpack.c.bf16 %v2166, %v2165
      %v2177 = vpack.c.bf16 %v2168, %v2167
      %v2178 = vpack.c.bf16 %v2170, %v2169
      %s2179 = scalar_lea.vmem %s474, 64
      %v2180 = vld [vmem:[%s2179] sm:$0xf]
      %v2181 = vld [vmem:[%s2179 + $0x4] sm:$0xf]
      %v2182 = vld [vmem:[%s2179 + $0x8] sm:$0xf]
      %v2183 = vld [vmem:[%s2179 + $0xc] sm:$0xf]
      %v2184 = vld [vmem:[%s2179 + $0x10] sm:$0xf]
      %v2185 = vld [vmem:[%s2179 + $0x14] sm:$0xf]
      %v2186 = vld [vmem:[%s2179 + $0x18] sm:$0xf]
      %v2187 = vld [vmem:[%s2179 + $0x1c] sm:$0xf]
      %v2188 = vld [vmem:[%s2179 + $0x20] sm:$0xf]
      %v2189 = vld [vmem:[%s2179 + $0x24] sm:$0xf]
      %v2190 = vld [vmem:[%s2179 + $0x28] sm:$0xf]
      %v2191 = vld [vmem:[%s2179 + $0x2c] sm:$0xf]
      %v2192 = vld [vmem:[%s2179 + $0x30] sm:$0xf]
      %v2193 = vld [vmem:[%s2179 + $0x34] sm:$0xf]
      %v2194 = vld [vmem:[%s2179 + $0x38] sm:$0xf]
      %v2195 = vld [vmem:[%s2179 + $0x3c] sm:$0xf]
      %s2196 = scalar_lea.vmem %s478, 1
      %v2197 = vld [vmem:[%s2196] sm:$0x1]
      %v2199 = vlaneseq
      %v2200 = vshrl.u32 %v2199, 7
      %v2201 = vsub.s32 0, %v2200
      %v2202 = vrot.slane %v2197, %v2201
      %v2220 = vunpack.c.l.b16 %v2180
      %v2221 = vunpack.c.l.b16 %v2181
      %v2222 = vunpack.c.l.b16 %v2182
      %v2223 = vunpack.c.l.b16 %v2183
      %v2224 = vunpack.c.l.b16 %v2184
      %v2225 = vunpack.c.l.b16 %v2185
      %v2226 = vunpack.c.l.b16 %v2186
      %v2227 = vunpack.c.l.b16 %v2187
      %v2228 = vunpack.c.l.b16 %v2188
      %v2229 = vunpack.c.l.b16 %v2189
      %v2230 = vunpack.c.l.b16 %v2190
      %v2231 = vunpack.c.l.b16 %v2191
      %v2232 = vunpack.c.l.b16 %v2192
      %v2233 = vunpack.c.l.b16 %v2193
      %v2234 = vunpack.c.l.b16 %v2194
      %v2235 = vunpack.c.l.b16 %v2195
      %v2236 = vpack.c.b16 %v2221, %v2220
      %v2237 = vpack.c.b16 %v2223, %v2222
      %v2238 = vpack.c.b16 %v2225, %v2224
      %v2239 = vpack.c.b16 %v2227, %v2226
      %v2240 = vpack.c.b16 %v2229, %v2228
      %v2241 = vpack.c.b16 %v2231, %v2230
      %v2242 = vpack.c.b16 %v2233, %v2232
      %v2243 = vpack.c.b16 %v2235, %v2234
      %2252 = vmatprep.subr.bf16.mxu0 0
      %2253 = vmatpush1.bf16.msra.mxu0 %v2236
      %2254 = vmatprep.subr.bf16.mxu0 0
      %2255 = vmatpush1.bf16.msra.mxu0 %v2237
      %2256 = vmatprep.subr.bf16.mxu0 0
      %2257 = vmatpush1.bf16.msra.mxu0 %v2238
      %2258 = vmatprep.subr.bf16.mxu0 0
      %2259 = vmatpush1.bf16.msra.mxu0 %v2239
      %2260 = vmatprep.subr.bf16.mxu0 0
      %2261 = vmatpush1.bf16.msra.mxu0 %v2240
      %2262 = vmatprep.subr.bf16.mxu0 0
      %2263 = vmatpush1.bf16.msra.mxu0 %v2241
      %2264 = vmatprep.subr.bf16.mxu0 0
      %2265 = vmatpush1.bf16.msra.mxu0 %v2242
      %2266 = vmatprep.subr.bf16.mxu0 0
      %2267 = vmatpush1.bf16.msra.mxu0 %v2243
      %2268 = vmatprep.subr.bf16.mxu0 0
      %2269 = vmatpush1.bf16.msra.mxu0 0
      %2270 = vmatprep.subr.bf16.mxu0 0
      %2271 = vmatpush1.bf16.msra.mxu0 0
      %2272 = vmatprep.subr.bf16.mxu0 0
      %2273 = vmatpush1.bf16.msra.mxu0 0
      %2274 = vmatprep.subr.bf16.mxu0 0
      %2275 = vmatpush1.bf16.msra.mxu0 0
      %2276 = vmatprep.subr.bf16.mxu0 0
      %2277 = vmatpush1.bf16.msra.mxu0 0
      %2278 = vmatprep.subr.bf16.mxu0 0
      %2279 = vmatpush1.bf16.msra.mxu0 0
      %2280 = vmatprep.subr.bf16.mxu0 0
      %2281 = vmatpush1.bf16.msra.mxu0 0
      %2282 = vmatprep.subr.bf16.mxu0 0
      %2283 = vmatpush1.bf16.msra.mxu0 0
      %2284 = vmatprep.mubr.bf16.mxu0 0
      %2285 = vmatmul.mubr.bf16.gmra.mrb[0].mxu0 %v2171
      %v2286 = vpop.f32.mrb[0].mxu0
      %v2287 = vadd.f32 %v2202, %v2286
      %v2288 = vpop.f32.mrb[0].mxu0
      %v2289 = vpop.f32.mrb[0].mxu0
      %v2290 = vadd.f32 %v2202, %v2289
      %v2291 = vpop.f32.mrb[0].mxu0
      %2292 = vmatprep.mubr.bf16.mxu0 0
      %2293 = vmatmul.mubr.bf16.gmra.mrb[0].mxu0 %v2172
      %v2294 = vpop.f32.mrb[0].mxu0
      %v2295 = vadd.f32 %v2202, %v2294
      %v2296 = vpop.f32.mrb[0].mxu0
      %v2297 = vpop.f32.mrb[0].mxu0
      %v2298 = vadd.f32 %v2202, %v2297
      %v2299 = vpop.f32.mrb[0].mxu0
      %2300 = vmatprep.mubr.bf16.mxu0 0
      %2301 = vmatmul.mubr.bf16.gmra.mrb[0].mxu0 %v2173
      %v2302 = vpop.f32.mrb[0].mxu0
      %v2303 = vadd.f32 %v2202, %v2302
      %v2304 = vpop.f32.mrb[0].mxu0
      %v2305 = vpop.f32.mrb[0].mxu0
      %v2306 = vadd.f32 %v2202, %v2305
      %v2307 = vpop.f32.mrb[0].mxu0
      %2308 = vmatprep.mubr.bf16.mxu0 0
      %2309 = vmatmul.mubr.bf16.gmra.mrb[0].mxu0 %v2174
      %v2310 = vpop.f32.mrb[0].mxu0
      %v2311 = vadd.f32 %v2202, %v2310
      %v2312 = vpop.f32.mrb[0].mxu0
      %v2313 = vpop.f32.mrb[0].mxu0
      %v2314 = vadd.f32 %v2202, %v2313
      %v2315 = vpop.f32.mrb[0].mxu0
      %2316 = vmatprep.mubr.bf16.mxu0 0
      %2317 = vmatmul.mubr.bf16.gmra.mrb[0].mxu0 %v2175
      %v2318 = vpop.f32.mrb[0].mxu0
      %v2319 = vadd.f32 %v2202, %v2318
      %v2320 = vpop.f32.mrb[0].mxu0
      %v2321 = vpop.f32.mrb[0].mxu0
      %v2322 = vadd.f32 %v2202, %v2321
      %v2323 = vpop.f32.mrb[0].mxu0
      %2324 = vmatprep.mubr.bf16.mxu0 0
      %2325 = vmatmul.mubr.bf16.gmra.mrb[0].mxu0 %v2176
      %v2326 = vpop.f32.mrb[0].mxu0
      %v2327 = vadd.f32 %v2202, %v2326
      %v2328 = vpop.f32.mrb[0].mxu0
      %v2329 = vpop.f32.mrb[0].mxu0
      %v2330 = vadd.f32 %v2202, %v2329
      %v2331 = vpop.f32.mrb[0].mxu0
      %2332 = vmatprep.mubr.bf16.mxu0 0
      %2333 = vmatmul.mubr.bf16.gmra.mrb[0].mxu0 %v2177
      %v2334 = vpop.f32.mrb[0].mxu0
      %v2335 = vadd.f32 %v2202, %v2334
      %v2336 = vpop.f32.mrb[0].mxu0
      %v2337 = vpop.f32.mrb[0].mxu0
      %v2338 = vadd.f32 %v2202, %v2337
      %v2339 = vpop.f32.mrb[0].mxu0
      %2340 = vmatprep.mubr.bf16.mxu0 0
      %2341 = vmatmul.mubr.bf16.gmra.mrb[0].mxu0 %v2178
      %v2342 = vpop.f32.mrb[0].mxu0
      %v2343 = vadd.f32 %v2202, %v2342
      %v2344 = vpop.f32.mrb[0].mxu0
      %v2345 = vpop.f32.mrb[0].mxu0
      %v2346 = vadd.f32 %v2202, %v2345
      %v2347 = vpop.f32.mrb[0].mxu0
      %2348 = vdwg.mxu0
      %v2349 = vmax.f32 %v2287, 0.0
      %v2350 = vmax.f32 %v2290, 0.0
      %v2351 = vmax.f32 %v2295, 0.0
      %v2352 = vmax.f32 %v2298, 0.0
      %v2353 = vmax.f32 %v2303, 0.0
      %v2354 = vmax.f32 %v2306, 0.0
      %v2355 = vmax.f32 %v2311, 0.0
      %v2356 = vmax.f32 %v2314, 0.0
      %v2357 = vmax.f32 %v2319, 0.0
      %v2358 = vmax.f32 %v2322, 0.0
      %v2359 = vmax.f32 %v2327, 0.0
      %v2360 = vmax.f32 %v2330, 0.0
      %v2361 = vmax.f32 %v2335, 0.0
      %v2362 = vmax.f32 %v2338, 0.0
      %v2363 = vmax.f32 %v2343, 0.0
      %v2364 = vmax.f32 %v2346, 0.0
      %v2365 = vpack.c.bf16 %v2350, %v2349
      %v2366 = vpack.c.bf16 %v2352, %v2351
      %v2367 = vpack.c.bf16 %v2354, %v2353
      %v2368 = vpack.c.bf16 %v2356, %v2355
      %v2369 = vpack.c.bf16 %v2358, %v2357
      %v2370 = vpack.c.bf16 %v2360, %v2359
      %v2371 = vpack.c.bf16 %v2362, %v2361
      %v2372 = vpack.c.bf16 %v2364, %v2363
      %v2373 = vld [vmem:[%s483] sm:$0xf]
      %v2374 = vld [vmem:[%s483 + $0x4] sm:$0xf]
      %v2375 = vld [vmem:[%s483 + $0x8] sm:$0xf]
      %v2376 = vld [vmem:[%s483 + $0xc] sm:$0xf]
      %v2377 = vld [vmem:[%s483 + $0x10] sm:$0xf]
      %v2378 = vld [vmem:[%s483 + $0x14] sm:$0xf]
      %v2379 = vld [vmem:[%s483 + $0x18] sm:$0xf]
      %v2380 = vld [vmem:[%s483 + $0x1c] sm:$0xf]
      %v2381 = vld [vmem:[%s483 + $0x20] sm:$0xf]
      %v2382 = vld [vmem:[%s483 + $0x24] sm:$0xf]
      %v2383 = vld [vmem:[%s483 + $0x28] sm:$0xf]
      %v2384 = vld [vmem:[%s483 + $0x2c] sm:$0xf]
      %v2385 = vld [vmem:[%s483 + $0x30] sm:$0xf]
      %v2386 = vld [vmem:[%s483 + $0x34] sm:$0xf]
      %v2387 = vld [vmem:[%s483 + $0x38] sm:$0xf]
      %v2388 = vld [vmem:[%s483 + $0x3c] sm:$0xf]
      %v2389 = vld [vmem:[%s486] sm:$0x1]
      %v2391 = vlaneseq
      %v2392 = vshrl.u32 %v2391, 7
      %v2393 = vsub.s32 0, %v2392
      %v2394 = vrot.slane %v2389, %v2393
      %v2412 = vunpack.c.l.b16 %v2373
      %v2413 = vunpack.c.l.b16 %v2374
      %v2414 = vunpack.c.l.b16 %v2375
      %v2415 = vunpack.c.l.b16 %v2376
      %v2416 = vunpack.c.l.b16 %v2377
      %v2417 = vunpack.c.l.b16 %v2378
      %v2418 = vunpack.c.l.b16 %v2379
      %v2419 = vunpack.c.l.b16 %v2380
      %v2420 = vunpack.c.l.b16 %v2381
      %v2421 = vunpack.c.l.b16 %v2382
      %v2422 = vunpack.c.l.b16 %v2383
      %v2423 = vunpack.c.l.b16 %v2384
      %v2424 = vunpack.c.l.b16 %v2385
      %v2425 = vunpack.c.l.b16 %v2386
      %v2426 = vunpack.c.l.b16 %v2387
      %v2427 = vunpack.c.l.b16 %v2388
      %v2428 = vpack.c.b16 %v2413, %v2412
      %v2429 = vpack.c.b16 %v2415, %v2414
      %v2430 = vpack.c.b16 %v2417, %v2416
      %v2431 = vpack.c.b16 %v2419, %v2418
      %v2432 = vpack.c.b16 %v2421, %v2420
      %v2433 = vpack.c.b16 %v2423, %v2422
      %v2434 = vpack.c.b16 %v2425, %v2424
      %v2435 = vpack.c.b16 %v2427, %v2426
      %2444 = vmatprep.subr.bf16.mxu0 0
      %2445 = vmatpush1.bf16.msra.mxu0 %v2428
      %2446 = vmatprep.subr.bf16.mxu0 0
      %2447 = vmatpush1.bf16.msra.mxu0 %v2429
      %2448 = vmatprep.subr.bf16.mxu0 0
      %2449 = vmatpush1.bf16.msra.mxu0 %v2430
      %2450 = vmatprep.subr.bf16.mxu0 0
      %2451 = vmatpush1.bf16.msra.mxu0 %v2431
      %2452 = vmatprep.subr.bf16.mxu0 0
      %2453 = vmatpush1.bf16.msra.mxu0 %v2432
      %2454 = vmatprep.subr.bf16.mxu0 0
      %2455 = vmatpush1.bf16.msra.mxu0 %v2433
      %2456 = vmatprep.subr.bf16.mxu0 0
      %2457 = vmatpush1.bf16.msra.mxu0 %v2434
      %2458 = vmatprep.subr.bf16.mxu0 0
      %2459 = vmatpush1.bf16.msra.mxu0 %v2435
      %2460 = vmatprep.subr.bf16.mxu0 0
      %2461 = vmatpush1.bf16.msra.mxu0 0
      %2462 = vmatprep.subr.bf16.mxu0 0
      %2463 = vmatpush1.bf16.msra.mxu0 0
      %2464 = vmatprep.subr.bf16.mxu0 0
      %2465 = vmatpush1.bf16.msra.mxu0 0
      %2466 = vmatprep.subr.bf16.mxu0 0
      %2467 = vmatpush1.bf16.msra.mxu0 0
      %2468 = vmatprep.subr.bf16.mxu0 0
      %2469 = vmatpush1.bf16.msra.mxu0 0
      %2470 = vmatprep.subr.bf16.mxu0 0
      %2471 = vmatpush1.bf16.msra.mxu0 0
      %2472 = vmatprep.subr.bf16.mxu0 0
      %2473 = vmatpush1.bf16.msra.mxu0 0
      %2474 = vmatprep.subr.bf16.mxu0 0
      %2475 = vmatpush1.bf16.msra.mxu0 0
      %2476 = vmatprep.mubr.bf16.mxu0 0
      %2477 = vmatmul.mubr.bf16.gmra.mrb[0].mxu0 %v2365
      %v2478 = vpop.f32.mrb[0].mxu0
      %v2479 = vadd.f32 %v2394, %v2478
      %v2480 = vpop.f32.mrb[0].mxu0
      %v2481 = vpop.f32.mrb[0].mxu0
      %v2482 = vadd.f32 %v2394, %v2481
      %v2483 = vpop.f32.mrb[0].mxu0
      %2484 = vmatprep.mubr.bf16.mxu0 0
      %2485 = vmatmul.mubr.bf16.gmra.mrb[0].mxu0 %v2366
      %v2486 = vpop.f32.mrb[0].mxu0
      %v2487 = vadd.f32 %v2394, %v2486
      %v2488 = vpop.f32.mrb[0].mxu0
      %v2489 = vpop.f32.mrb[0].mxu0
      %v2490 = vadd.f32 %v2394, %v2489
      %v2491 = vpop.f32.mrb[0].mxu0
      %2492 = vmatprep.mubr.bf16.mxu0 0
      %2493 = vmatmul.mubr.bf16.gmra.mrb[0].mxu0 %v2367
      %v2494 = vpop.f32.mrb[0].mxu0
      %v2495 = vadd.f32 %v2394, %v2494
      %v2496 = vpop.f32.mrb[0].mxu0
      %v2497 = vpop.f32.mrb[0].mxu0
      %v2498 = vadd.f32 %v2394, %v2497
      %v2499 = vpop.f32.mrb[0].mxu0
      %2500 = vmatprep.mubr.bf16.mxu0 0
      %2501 = vmatmul.mubr.bf16.gmra.mrb[0].mxu0 %v2368
      %v2502 = vpop.f32.mrb[0].mxu0
      %v2503 = vadd.f32 %v2394, %v2502
      %v2504 = vpop.f32.mrb[0].mxu0
      %v2505 = vpop.f32.mrb[0].mxu0
      %v2506 = vadd.f32 %v2394, %v2505
      %v2507 = vpop.f32.mrb[0].mxu0
      %2508 = vmatprep.mubr.bf16.mxu0 0
      %2509 = vmatmul.mubr.bf16.gmra.mrb[0].mxu0 %v2369
      %v2510 = vpop.f32.mrb[0].mxu0
      %v2511 = vadd.f32 %v2394, %v2510
      %v2512 = vpop.f32.mrb[0].mxu0
      %v2513 = vpop.f32.mrb[0].mxu0
      %v2514 = vadd.f32 %v2394, %v2513
      %v2515 = vpop.f32.mrb[0].mxu0
      %2516 = vmatprep.mubr.bf16.mxu0 0
      %2517 = vmatmul.mubr.bf16.gmra.mrb[0].mxu0 %v2370
      %v2518 = vpop.f32.mrb[0].mxu0
      %v2519 = vadd.f32 %v2394, %v2518
      %v2520 = vpop.f32.mrb[0].mxu0
      %v2521 = vpop.f32.mrb[0].mxu0
      %v2522 = vadd.f32 %v2394, %v2521
      %v2523 = vpop.f32.mrb[0].mxu0
      %2524 = vmatprep.mubr.bf16.mxu0 0
      %2525 = vmatmul.mubr.bf16.gmra.mrb[0].mxu0 %v2371
      %v2526 = vpop.f32.mrb[0].mxu0
      %v2527 = vadd.f32 %v2394, %v2526
      %v2528 = vpop.f32.mrb[0].mxu0
      %v2529 = vpop.f32.mrb[0].mxu0
      %v2530 = vadd.f32 %v2394, %v2529
      %v2531 = vpop.f32.mrb[0].mxu0
      %2532 = vmatprep.mubr.bf16.mxu0 0
      %2533 = vmatmul.mubr.bf16.gmra.mrb[0].mxu0 %v2372
      %v2534 = vpop.f32.mrb[0].mxu0
      %v2535 = vadd.f32 %v2394, %v2534
      %v2536 = vpop.f32.mrb[0].mxu0
      %v2537 = vpop.f32.mrb[0].mxu0
      %v2538 = vadd.f32 %v2394, %v2537
      %v2539 = vpop.f32.mrb[0].mxu0
      %2540 = vdwg.mxu0
      %v2541 = vpack.c.bf16 %v2482, %v2479
      %v2542 = vpack.c.bf16 %v2490, %v2487
      %v2543 = vpack.c.bf16 %v2498, %v2495
      %v2544 = vpack.c.bf16 %v2506, %v2503
      %v2545 = vpack.c.bf16 %v2514, %v2511
      %v2546 = vpack.c.bf16 %v2522, %v2519
      %v2547 = vpack.c.bf16 %v2530, %v2527
      %v2548 = vpack.c.bf16 %v2538, %v2535
      %v2557 = vunpack.c.l.b16 %v2541
      %v2558 = vunpack.c.h.b16 %v2541
      %v2559 = vunpack.c.l.b16 %v2542
      %v2560 = vunpack.c.h.b16 %v2542
      %v2561 = vunpack.c.l.b16 %v2543
      %v2562 = vunpack.c.h.b16 %v2543
      %v2563 = vunpack.c.l.b16 %v2544
      %v2564 = vunpack.c.h.b16 %v2544
      %v2565 = vunpack.c.l.b16 %v2545
      %v2566 = vunpack.c.h.b16 %v2545
      %v2567 = vunpack.c.l.b16 %v2546
      %v2568 = vunpack.c.h.b16 %v2546
      %v2569 = vunpack.c.l.b16 %v2547
      %v2570 = vunpack.c.h.b16 %v2547
      %v2571 = vunpack.c.l.b16 %v2548
      %v2572 = vunpack.c.h.b16 %v2548
      %v2573 = vpack.c.b16 %v2557, %v2557
      %v2574 = vpack.c.b16 %v2558, %v2558
      %v2575 = vpack.c.b16 %v2559, %v2559
      %v2576 = vpack.c.b16 %v2560, %v2560
      %v2577 = vpack.c.b16 %v2561, %v2561
      %v2578 = vpack.c.b16 %v2562, %v2562
      %v2579 = vpack.c.b16 %v2563, %v2563
      %v2580 = vpack.c.b16 %v2564, %v2564
      %v2581 = vpack.c.b16 %v2565, %v2565
      %v2582 = vpack.c.b16 %v2566, %v2566
      %v2583 = vpack.c.b16 %v2567, %v2567
      %v2584 = vpack.c.b16 %v2568, %v2568
      %v2585 = vpack.c.b16 %v2569, %v2569
      %v2586 = vpack.c.b16 %v2570, %v2570
      %v2587 = vpack.c.b16 %v2571, %v2571
      %v2588 = vpack.c.b16 %v2572, %v2572
      %2605 = vst [vmem:[%s499] sm:$0xf] %v2573
      %2606 = vst [vmem:[%s499 + $0x4] sm:$0xf] %v2574
      %2607 = vst [vmem:[%s499 + $0x8] sm:$0xf] %v2575
      %2608 = vst [vmem:[%s499 + $0xc] sm:$0xf] %v2576
      %2609 = vst [vmem:[%s499 + $0x10] sm:$0xf] %v2577
      %2610 = vst [vmem:[%s499 + $0x14] sm:$0xf] %v2578
      %2611 = vst [vmem:[%s499 + $0x18] sm:$0xf] %v2579
      %2612 = vst [vmem:[%s499 + $0x1c] sm:$0xf] %v2580
      %2613 = vst [vmem:[%s499 + $0x20] sm:$0xf] %v2581
      %2614 = vst [vmem:[%s499 + $0x24] sm:$0xf] %v2582
      %2615 = vst [vmem:[%s499 + $0x28] sm:$0xf] %v2583
      %2616 = vst [vmem:[%s499 + $0x2c] sm:$0xf] %v2584
      %2617 = vst [vmem:[%s499 + $0x30] sm:$0xf] %v2585
      %2618 = vst [vmem:[%s499 + $0x34] sm:$0xf] %v2586
      %2619 = vst [vmem:[%s499 + $0x38] sm:$0xf] %v2587
      %2620 = vst [vmem:[%s499 + $0x3c] sm:$0xf] %v2588
      %s2621 = smul.u32 16, %s25
      %p2622 = scmp.lt.s32.totalorder %s24, 0
      %s2623 = scalar_select %p2622, %s24, 0
      %p2624 = scmp.lt.s32.totalorder %s26, 1
      %s2625 = scalar_select %p2624, %s26, 1
      %p2626 = scmp.lt.s32.totalorder %s2621, 15
      %s2627 = scalar_select %p2626, %s2621, 15
      %s2628 = smul.addr %s2625, 16
      %s2629 = sadd.s32 %s2627, %s2628
      %s2630 = smul.addr %s2623, 32
      %s2631 = sadd.s32 %s2629, %s2630
      %s2632 = smul.addr %s2631, 4
      %s2633 = scalar_lea.vmem %s8, %s2632
      // Predicated region
      $region53: #{_lambda_.1} parent=51 // pred_check
        %p2634 = pneg %p272
      $region54: #{_lambda_.1} parent=51 // pred_check_branch
        %2636 = sbr.rel (%p2634) target = $region56
      $region55: #{_lambda_.1} parent=51 // pred_region
        %s2637 = smul.u32 16, %s25
      $region56: #{_lambda_.1} parent=51 // pred_fallthru
        _
    $region52: #{_lambda_.1} parent=5 // pred_fallthru
      _
    %p2638 = scmp.le.s32.totalorder 2, %s14
    // Predicated region
    $region57: #{_lambda_.1} parent=5 // pred_check
      %p2639 = pneg %p2638
    $region58: #{_lambda_.1} parent=5 // pred_check_branch
      %2641 = sbr.rel (%p2639) target = $region60
    $region59: #{_lambda_.1} parent=5 // pred_region
      %s2642 = ssub.s32 %s14, 2
      // Predicated region
      $region61: #{_lambda_.1} parent=59 // pred_check
        %p2643 = pneg %p278
      $region62: #{_lambda_.1} parent=59 // pred_check_branch
        %2645 = sbr.rel (%p2643) target = $region64
      $region63: #{_lambda_.1} parent=59 // pred_region
        %s2646 = smul.u32 16, %s28
        %p2647 = scmp.lt.s32.totalorder %s27, 0
        %s2648 = scalar_select %p2647, %s27, 0
        %p2649 = scmp.lt.s32.totalorder %s29, 1
        %s2650 = scalar_select %p2649, %s29, 1
        %p2651 = scmp.lt.s32.totalorder %s2646, 15
        %s2652 = scalar_select %p2651, %s2646, 15
        %s2653 = smul.addr %s2650, 16
        %s2654 = sadd.s32 %s2652, %s2653
        %s2655 = smul.addr %s2648, 32
        %s2656 = sadd.s32 %s2654, %s2655
        %s2657 = smul.addr %s2656, 4
        %s2658 = scalar_lea.vmem %s8, %s2657
      $region64: #{_lambda_.1} parent=59 // pred_fallthru
        _
    $region60: #{_lambda_.1} parent=5 // pred_fallthru
      _
  $region6: #{_lambda_.1} parent=0 // loop_footer
    %s18 = sadd.s32 1, %s14
  $region7: #{_lambda_.1} parent=0 // loop_footer_branch
    %13 = sbr.rel target = $region3
  $region8: #{_lambda_.1} parent=0 // loop_exit
    _

</llo_original>
